<compile_context>
chip_gen: v7x
topology: tpu7x:2x2x1
jax: 0.10.0
libtpu: 0.0.40
codegen_flags: <defaults>
</compile_context>

<pallas_src>
import functools

import jax
import jax.numpy as jnp
from jax import lax
from jax.experimental import pallas as pl
from jax.experimental.pallas import tpu as pltpu


def _kernel(domain_dim, t_max,
            x_ref,
            we1_ref, be1_ref, we2_ref, be2_ref,      # encoder MLP
            wh_ref, bh_ref,                          # fused [ray | scale] head
            pivot_ref, hi_mp_ref, lo_mp_ref,         # pivot, hi-pivot, lo-pivot
            wd1_ref, bd1_ref, wd2_ref, bd2_ref,      # decoder MLP
            out_ref):
    f32 = jnp.float32
    x = x_ref[...].astype(f32)                                            # (TB, F)

    # ---- encoder: Linear -> ReLU -> Linear ----
    h = jnp.dot(x, we1_ref[...], preferred_element_type=f32) + be1_ref[...]
    h = jnp.maximum(h, 0.0)
    latent = jnp.dot(h, we2_ref[...], preferred_element_type=f32) + be2_ref[...]  # (TB, E)

    # ---- fused heads: one matmul producing [ray | scale] ----
    y = jnp.dot(latent, wh_ref[...], preferred_element_type=f32) + bh_ref[...]    # (TB, D+1)
    ray = y[:, :domain_dim]                                               # (TB, D)
    scale = y[:, domain_dim:domain_dim + 1]                               # (TB, 1)

    # ---- generate-inside layer (closed-form box/ray slab intersection) ----
    # TODO(synk): the original layer takes an arbitrary injected `domain`;
    # the membership/boundary test here is specialized to an axis-aligned box.
    eps = 1e-12
    dirn = ray * lax.rsqrt(jnp.sum(ray * ray, axis=-1, keepdims=True) + eps)  # unit rays

    pivot = pivot_ref[...]                                                # (1, D)
    hi_minus_p = hi_mp_ref[...]                                           # > 0 (pivot inside)
    lo_minus_p = lo_mp_ref[...]                                           # < 0

    # One select picks the facing slab bound, one divide gives its distance;
    # near-zero components fall back to t_max (discarded by the lane-min).
    eps_dir = 1e-8
    is_big = jnp.abs(dirn) > eps_dir
    bound = jnp.where(dirn >= 0.0, hi_minus_p, lo_minus_p)                # (TB, D)
    safe_dir = jnp.where(is_big, dirn, eps_dir)
    t_d = jnp.where(is_big, bound / safe_dir, t_max)                      # (TB, D)
    t_b = jnp.minimum(jnp.min(t_d, axis=-1, keepdims=True), t_max)        # (TB, 1)

    s = jax.nn.sigmoid(scale)                                             # in (0, 1)
    xs_inside = pivot + s * t_b * dirn                                    # strictly inside box

    # ---- decoder: Linear -> ReLU -> Linear ----
    hd = jnp.dot(xs_inside, wd1_ref[...], preferred_element_type=f32) + bd1_ref[...]
    hd = jnp.maximum(hd, 0.0)
    out = jnp.dot(hd, wd2_ref[...], preferred_element_type=f32) + bd2_ref[...]
    out_ref[...] = out.astype(out_ref.dtype)


def simple_constrained_nn(x, params, *, t_max=4.0, block_batch=512):
    """Fused forward pass.  x: (B, F) f32.  Returns (B, OUT) f32.

    The exact slab intersection replaces the reference n_iter bisection
    (it is its n_iter -> inf limit), so no `n_iter` argument is needed.
    """
    batch, in_features = x.shape
    domain_dim = params["wr"].shape[1]
    out_dim = params["wd2"].shape[1]

    # Fuse the two heads into one (E, D+1) matmul.
    w_head = jnp.concatenate([params["wr"], params["ws"]], axis=1)
    b_head = jnp.concatenate([params["br"], params["bs"]], axis=1)

    # Precompute the box extents relative to the pivot (removes two in-kernel
    # subtracts and one resident input).
    hi_mp = params["hi"] - params["pivot"]
    lo_mp = params["lo"] - params["pivot"]

    # Batch tiling: prefer one big tile (no pad, no per-step overhead); only
    # pad when batch exceeds block_batch and is not tile-divisible.  Padding
    # with zero rows is numerically safe (rsqrt has +eps, ray is bias-driven).
    if batch <= block_batch:
        tb = batch                      # full-extent block: no (8,128) issue
        padded = batch
    else:
        tb = (block_batch // 8) * 8     # keep sublane alignment
        padded = pl.cdiv(batch, tb) * tb
        if padded != batch:
            x = jnp.pad(x, ((0, padded - batch), (0, 0)))
    grid = (padded // tb,)

    weights = (
        params["we1"], params["be1"], params["we2"], params["be2"],
        w_head, b_head,
        params["pivot"], hi_mp, lo_mp,
        params["wd1"], params["bd1"], params["wd2"], params["bd2"],
    )

    def resident_spec(a):
        nd = a.ndim
        # Constant block index -> resident in VMEM across grid steps; a single
        # buffer suffices (no refetch), halving weight VMEM vs. the default.
        return pl.BlockSpec(a.shape, lambda i, _nd=nd: (0,) * _nd,
                            pipeline_mode=pl.Buffered(1))

    # VMEM budget (bytes): double-buffered x/out tiles + single-buffered
    # weights + a handful of live (tb, width) f32 intermediates + Mosaic
    # scratch headroom.  Clamped well under v7x's 64 MiB physical VMEM.
    itemsize = 4
    weight_bytes = sum(int(w.size) * itemsize for w in weights)
    io_bytes = 2 * (tb * in_features + tb * out_dim) * itemsize
    max_width = max(params["we1"].shape[1], params["we2"].shape[1],
                    w_head.shape[1], params["wd1"].shape[1],
                    out_dim, in_features)
    interm_bytes = 6 * tb * max_width * itemsize
    vmem_limit = int(min(48 << 20,
                         max(4 << 20,
                             weight_bytes + io_bytes + interm_bytes + (2 << 20))))

    out = pl.pallas_call(
        functools.partial(_kernel, domain_dim, t_max),
        out_shape=jax.ShapeDtypeStruct((padded, out_dim), jnp.float32),
        grid=grid,
        in_specs=[pl.BlockSpec((tb, in_features), lambda i: (i, 0))]
                 + [resident_spec(w) for w in weights],
        out_specs=pl.BlockSpec((tb, out_dim), lambda i: (i, 0)),
        compiler_params=pltpu.CompilerParams(
            dimension_semantics=("parallel",),
            vmem_limit_bytes=vmem_limit),
    )(x, *weights)
    return out[:batch]


def _reference_forward(x, params, *, t_max=4.0):
    """Pure-JAX reference (same math as the kernel, un-fused)."""
    h = jnp.maximum(x @ params["we1"] + params["be1"], 0.0)
    latent = h @ params["we2"] + params["be2"]
    ray = latent @ params["wr"] + params["br"]
    scale = latent @ params["ws"] + params["bs"]
    dirn = ray * lax.rsqrt(jnp.sum(ray * ray, axis=-1, keepdims=True) + 1e-12)
    pivot, lo, hi = params["pivot"], params["lo"], params["hi"]
    eps_dir = 1e-8
    safe_dir = jnp.where(jnp.abs(dirn) > eps_dir, dirn, eps_dir)
    t_d = jnp.where(dirn > eps_dir, (hi - pivot) / safe_dir,
                    jnp.where(dirn < -eps_dir, (lo - pivot) / safe_dir, t_max))
    t_b = jnp.minimum(jnp.min(t_d, axis=-1, keepdims=True), t_max)
    xs = pivot + jax.nn.sigmoid(scale) * t_b * dirn
    hd = jnp.maximum(xs @ params["wd1"] + params["bd1"], 0.0)
    return hd @ params["wd2"] + params["bd2"]


def init_params(key, in_features, hidden, encoder_outs, domain_dim, dec_hidden, out_features):
    """Deterministic PyTorch-Linear-like init (uniform(-1/sqrt(fan_in), 1/sqrt(fan_in)))."""
    def linear(k, fan_in, fan_out):
        kw, kb = jax.random.split(k)
        bound = 1.0 / jnp.sqrt(fan_in)
        w = jax.random.uniform(kw, (fan_in, fan_out), jnp.float32, -bound, bound)
        b = jax.random.uniform(kb, (1, fan_out), jnp.float32, -bound, bound)
        return w, b

    ks = jax.random.split(key, 6)
    we1, be1 = linear(ks[0], in_features, hidden)
    we2, be2 = linear(ks[1], hidden, encoder_outs)
    wr, br = linear(ks[2], encoder_outs, domain_dim)     # latent_to_ray
    ws, bs = linear(ks[3], encoder_outs, 1)              # latent_to_scale
    wd1, bd1 = linear(ks[4], domain_dim, dec_hidden)
    wd2, bd2 = linear(ks[5], dec_hidden, out_features)

    pivot = jnp.zeros((1, domain_dim), jnp.float32)      # pivot at box center
    lo = jnp.full((1, domain_dim), -1.0, jnp.float32)    # domain = [-1, 1]^D
    hi = jnp.full((1, domain_dim), 1.0, jnp.float32)

    return dict(we1=we1, be1=be1, we2=we2, be2=be2,
                wr=wr, br=br, ws=ws, bs=bs,
                pivot=pivot, lo=lo, hi=hi,
                wd1=wd1, bd1=bd1, wd2=wd2, bd2=bd2)


if __name__ == "__main__":
    # small shapes consistent with the module's forward
    BATCH, IN_FEATURES, HIDDEN = 128, 16, 32
    ENCODER_OUTS, DOMAIN_DIM = 32, 8     # decoder_ins == domain dim
    DEC_HIDDEN, OUT_FEATURES = 32, 16

    key = jax.random.PRNGKey(0)
    k_x, k_p = jax.random.split(key)
    x = jax.random.normal(k_x, (BATCH, IN_FEATURES), jnp.float32)
    params = init_params(k_p, IN_FEATURES, HIDDEN, ENCODER_OUTS,
                         DOMAIN_DIM, DEC_HIDDEN, OUT_FEATURES)

    out = simple_constrained_nn(x, params, t_max=4.0)
    out = jax.block_until_ready(out)
    assert out.shape == (BATCH, OUT_FEATURES) and out.dtype == jnp.float32
    assert bool(jnp.all(jnp.isfinite(out)))

    ref = _reference_forward(x, params, t_max=4.0)
    assert bool(jnp.allclose(out, ref, atol=1e-4, rtol=1e-4)), "mismatch vs reference"
    print("KERNEL_OK")
</pallas_src>

<mosaic_0001>
module attributes {stable_mosaic.version = 11 : i64} {
  func.func @_kernel(%arg0: i32, %arg1: memref<128x16xf32, #tpu.memory_space<vmem>>, %arg2: memref<16x32xf32, #tpu.memory_space<vmem>>, %arg3: memref<1x32xf32, #tpu.memory_space<vmem>>, %arg4: memref<32x32xf32, #tpu.memory_space<vmem>>, %arg5: memref<1x32xf32, #tpu.memory_space<vmem>>, %arg6: memref<32x9xf32, #tpu.memory_space<vmem>>, %arg7: memref<1x9xf32, #tpu.memory_space<vmem>>, %arg8: memref<1x8xf32, #tpu.memory_space<vmem>>, %arg9: memref<1x8xf32, #tpu.memory_space<vmem>>, %arg10: memref<1x8xf32, #tpu.memory_space<vmem>>, %arg11: memref<8x32xf32, #tpu.memory_space<vmem>>, %arg12: memref<1x32xf32, #tpu.memory_space<vmem>>, %arg13: memref<32x16xf32, #tpu.memory_space<vmem>>, %arg14: memref<1x16xf32, #tpu.memory_space<vmem>>, %arg15: memref<128x16xf32, #tpu.memory_space<vmem>>) attributes {dimension_semantics = [#tpu.dimension_semantics<parallel>], iteration_bounds = array<i64: 1>, scalar_prefetch = 0 : i64, scratch_operands = 0 : i64, tpu.core_type = #tpu.core_type<tc>, window_params = [{transform_indices = @transform_0, window_bounds = array<i64: 128, 16>}, {pipeline_mode = #tpu.pipeline_mode<synchronous>, transform_indices = @transform_1, window_bounds = array<i64: 16, 32>}, {pipeline_mode = #tpu.pipeline_mode<synchronous>, transform_indices = @transform_2, window_bounds = array<i64: 1, 32>}, {pipeline_mode = #tpu.pipeline_mode<synchronous>, transform_indices = @transform_3, window_bounds = array<i64: 32, 32>}, {pipeline_mode = #tpu.pipeline_mode<synchronous>, transform_indices = @transform_4, window_bounds = array<i64: 1, 32>}, {pipeline_mode = #tpu.pipeline_mode<synchronous>, transform_indices = @transform_5, window_bounds = array<i64: 32, 9>}, {pipeline_mode = #tpu.pipeline_mode<synchronous>, transform_indices = @transform_6, window_bounds = array<i64: 1, 9>}, {pipeline_mode = #tpu.pipeline_mode<synchronous>, transform_indices = @transform_7, window_bounds = array<i64: 1, 8>}, {pipeline_mode = #tpu.pipeline_mode<synchronous>, transform_indices = @transform_8, window_bounds = array<i64: 1, 8>}, {pipeline_mode = #tpu.pipeline_mode<synchronous>, transform_indices = @transform_9, window_bounds = array<i64: 1, 8>}, {pipeline_mode = #tpu.pipeline_mode<synchronous>, transform_indices = @transform_10, window_bounds = array<i64: 8, 32>}, {pipeline_mode = #tpu.pipeline_mode<synchronous>, transform_indices = @transform_11, window_bounds = array<i64: 1, 32>}, {pipeline_mode = #tpu.pipeline_mode<synchronous>, transform_indices = @transform_12, window_bounds = array<i64: 32, 16>}, {pipeline_mode = #tpu.pipeline_mode<synchronous>, transform_indices = @transform_13, window_bounds = array<i64: 1, 16>}, {transform_indices = @transform_14, window_bounds = array<i64: 128, 16>}]} {
    %c0 = arith.constant 0 : index
    %c0_0 = arith.constant 0 : index
    %0 = vector.load %arg1[%c0, %c0_0] : memref<128x16xf32, #tpu.memory_space<vmem>>, vector<128x16xf32>
    %c0_1 = arith.constant 0 : index
    %c0_2 = arith.constant 0 : index
    %1 = vector.load %arg2[%c0_1, %c0_2] : memref<16x32xf32, #tpu.memory_space<vmem>>, vector<16x32xf32>
    %cst = arith.constant dense<0.000000e+00> : vector<128x32xf32>
    %2 = tpu.matmul %0, %1, %cst {dimension_numbers = #tpu.dot_dimension_numbers<[1], [0], [0], [1], [0, 0, 1, 1], [], []>} : vector<128x16xf32>, vector<16x32xf32>, vector<128x32xf32> -> vector<128x32xf32>
    %c0_3 = arith.constant 0 : index
    %c0_4 = arith.constant 0 : index
    %3 = vector.load %arg3[%c0_3, %c0_4] : memref<1x32xf32, #tpu.memory_space<vmem>>, vector<1x32xf32>
    %4 = vector.broadcast %3 : vector<1x32xf32> to vector<128x32xf32>
    %5 = arith.addf %2, %4 : vector<128x32xf32>
    %cst_5 = arith.constant 0.000000e+00 : f32
    %6 = vector.broadcast %cst_5 : f32 to vector<128x32xf32>
    %7 = arith.maximumf %5, %6 : vector<128x32xf32>
    %c0_6 = arith.constant 0 : index
    %c0_7 = arith.constant 0 : index
    %8 = vector.load %arg4[%c0_6, %c0_7] : memref<32x32xf32, #tpu.memory_space<vmem>>, vector<32x32xf32>
    %cst_8 = arith.constant dense<0.000000e+00> : vector<128x32xf32>
    %9 = tpu.matmul %7, %8, %cst_8 {dimension_numbers = #tpu.dot_dimension_numbers<[1], [0], [0], [1], [0, 0, 1, 1], [], []>} : vector<128x32xf32>, vector<32x32xf32>, vector<128x32xf32> -> vector<128x32xf32>
    %c0_9 = arith.constant 0 : index
    %c0_10 = arith.constant 0 : index
    %10 = vector.load %arg5[%c0_9, %c0_10] : memref<1x32xf32, #tpu.memory_space<vmem>>, vector<1x32xf32>
    %11 = vector.broadcast %10 : vector<1x32xf32> to vector<128x32xf32>
    %12 = arith.addf %9, %11 : vector<128x32xf32>
    %c0_11 = arith.constant 0 : index
    %c0_12 = arith.constant 0 : index
    %13 = vector.load %arg6[%c0_11, %c0_12] : memref<32x9xf32, #tpu.memory_space<vmem>>, vector<32x9xf32>
    %cst_13 = arith.constant dense<0.000000e+00> : vector<128x9xf32>
    %14 = tpu.matmul %12, %13, %cst_13 {dimension_numbers = #tpu.dot_dimension_numbers<[1], [0], [0], [1], [0, 0, 1, 1], [], []>} : vector<128x32xf32>, vector<32x9xf32>, vector<128x9xf32> -> vector<128x9xf32>
    %c0_14 = arith.constant 0 : index
    %c0_15 = arith.constant 0 : index
    %15 = vector.load %arg7[%c0_14, %c0_15] : memref<1x9xf32, #tpu.memory_space<vmem>>, vector<1x9xf32>
    %16 = vector.broadcast %15 : vector<1x9xf32> to vector<128x9xf32>
    %17 = arith.addf %14, %16 : vector<128x9xf32>
    %18 = vector.extract_strided_slice %17 {offsets = [0, 0], sizes = [128, 8], strides = [1, 1]} : vector<128x9xf32> to vector<128x8xf32>
    %19 = vector.extract_strided_slice %17 {offsets = [0, 8], sizes = [128, 1], strides = [1, 1]} : vector<128x9xf32> to vector<128x1xf32>
    %20 = arith.mulf %18, %18 : vector<128x8xf32>
    %cst_16 = arith.constant dense<0.000000e+00> : vector<128xf32>
    %21 = vector.multi_reduction <add>, %20, %cst_16 [1] : vector<128x8xf32> to vector<128xf32>
    %22 = vector.shape_cast %21 : vector<128xf32> to vector<128x1xf32>
    %cst_17 = arith.constant 9.99999996E-13 : f32
    %23 = vector.broadcast %cst_17 : f32 to vector<128x1xf32>
    %24 = arith.addf %22, %23 : vector<128x1xf32>
    %25 = math.rsqrt %24 : vector<128x1xf32>
    %26 = vector.broadcast %25 : vector<128x1xf32> to vector<128x8xf32>
    %27 = arith.mulf %18, %26 : vector<128x8xf32>
    %c0_18 = arith.constant 0 : index
    %c0_19 = arith.constant 0 : index
    %28 = vector.load %arg8[%c0_18, %c0_19] : memref<1x8xf32, #tpu.memory_space<vmem>>, vector<1x8xf32>
    %c0_20 = arith.constant 0 : index
    %c0_21 = arith.constant 0 : index
    %29 = vector.load %arg9[%c0_20, %c0_21] : memref<1x8xf32, #tpu.memory_space<vmem>>, vector<1x8xf32>
    %c0_22 = arith.constant 0 : index
    %c0_23 = arith.constant 0 : index
    %30 = vector.load %arg10[%c0_22, %c0_23] : memref<1x8xf32, #tpu.memory_space<vmem>>, vector<1x8xf32>
    %31 = math.absf %27 : vector<128x8xf32>
    %cst_24 = arith.constant 9.99999993E-9 : f32
    %32 = vector.broadcast %cst_24 : f32 to vector<128x8xf32>
    %33 = arith.cmpf ogt, %31, %32 : vector<128x8xf32>
    %cst_25 = arith.constant 0.000000e+00 : f32
    %34 = vector.broadcast %cst_25 : f32 to vector<128x8xf32>
    %35 = arith.cmpf oge, %27, %34 : vector<128x8xf32>
    %36 = vector.shape_cast %29 : vector<1x8xf32> to vector<1x8xf32>
    %37 = vector.broadcast %36 : vector<1x8xf32> to vector<128x8xf32>
    %38 = vector.shape_cast %30 : vector<1x8xf32> to vector<1x8xf32>
    %39 = vector.broadcast %38 : vector<1x8xf32> to vector<128x8xf32>
    %40 = arith.select %35, %37, %39 : vector<128x8xi1>, vector<128x8xf32>
    %cst_26 = arith.constant 9.99999993E-9 : f32
    %41 = vector.broadcast %cst_26 : f32 to vector<128x8xf32>
    %42 = arith.select %33, %27, %41 : vector<128x8xi1>, vector<128x8xf32>
    %43 = arith.divf %40, %42 : vector<128x8xf32>
    %cst_27 = arith.constant 4.000000e+00 : f32
    %44 = vector.broadcast %cst_27 : f32 to vector<128x8xf32>
    %45 = arith.select %33, %43, %44 : vector<128x8xi1>, vector<128x8xf32>
    %cst_28 = arith.constant dense<0x7F800000> : vector<128xf32>
    %46 = vector.multi_reduction <minimumf>, %45, %cst_28 [1] : vector<128x8xf32> to vector<128xf32>
    %47 = vector.shape_cast %46 : vector<128xf32> to vector<128x1xf32>
    %cst_29 = arith.constant 4.000000e+00 : f32
    %48 = vector.broadcast %cst_29 : f32 to vector<128x1xf32>
    %49 = arith.minimumf %47, %48 : vector<128x1xf32>
    %50 = arith.negf %19 : vector<128x1xf32>
    %51 = math.exp %50 : vector<128x1xf32>
    %cst_30 = arith.constant 1.000000e+00 : f32
    %52 = vector.broadcast %cst_30 : f32 to vector<128x1xf32>
    %53 = arith.addf %52, %51 : vector<128x1xf32>
    %54 = arith.divf %52, %53 : vector<128x1xf32>
    %55 = arith.mulf %54, %49 : vector<128x1xf32>
    %56 = vector.broadcast %55 : vector<128x1xf32> to vector<128x8xf32>
    %57 = arith.mulf %56, %27 : vector<128x8xf32>
    %58 = vector.broadcast %28 : vector<1x8xf32> to vector<128x8xf32>
    %59 = arith.addf %58, %57 : vector<128x8xf32>
    %c0_31 = arith.constant 0 : index
    %c0_32 = arith.constant 0 : index
    %60 = vector.load %arg11[%c0_31, %c0_32] : memref<8x32xf32, #tpu.memory_space<vmem>>, vector<8x32xf32>
    %cst_33 = arith.constant dense<0.000000e+00> : vector<128x32xf32>
    %61 = tpu.matmul %59, %60, %cst_33 {dimension_numbers = #tpu.dot_dimension_numbers<[1], [0], [0], [1], [0, 0, 1, 1], [], []>} : vector<128x8xf32>, vector<8x32xf32>, vector<128x32xf32> -> vector<128x32xf32>
    %c0_34 = arith.constant 0 : index
    %c0_35 = arith.constant 0 : index
    %62 = vector.load %arg12[%c0_34, %c0_35] : memref<1x32xf32, #tpu.memory_space<vmem>>, vector<1x32xf32>
    %63 = vector.broadcast %62 : vector<1x32xf32> to vector<128x32xf32>
    %64 = arith.addf %61, %63 : vector<128x32xf32>
    %cst_36 = arith.constant 0.000000e+00 : f32
    %65 = vector.broadcast %cst_36 : f32 to vector<128x32xf32>
    %66 = arith.maximumf %64, %65 : vector<128x32xf32>
    %c0_37 = arith.constant 0 : index
    %c0_38 = arith.constant 0 : index
    %67 = vector.load %arg13[%c0_37, %c0_38] : memref<32x16xf32, #tpu.memory_space<vmem>>, vector<32x16xf32>
    %cst_39 = arith.constant dense<0.000000e+00> : vector<128x16xf32>
    %68 = tpu.matmul %66, %67, %cst_39 {dimension_numbers = #tpu.dot_dimension_numbers<[1], [0], [0], [1], [0, 0, 1, 1], [], []>} : vector<128x32xf32>, vector<32x16xf32>, vector<128x16xf32> -> vector<128x16xf32>
    %c0_40 = arith.constant 0 : index
    %c0_41 = arith.constant 0 : index
    %69 = vector.load %arg14[%c0_40, %c0_41] : memref<1x16xf32, #tpu.memory_space<vmem>>, vector<1x16xf32>
    %70 = vector.broadcast %69 : vector<1x16xf32> to vector<128x16xf32>
    %71 = arith.addf %68, %70 : vector<128x16xf32>
    %c0_42 = arith.constant 0 : index
    %c0_43 = arith.constant 0 : index
    %72 = vector.load %arg15[%c0_42, %c0_43] : memref<128x16xf32, #tpu.memory_space<vmem>>, vector<128x16xf32>
    tpu.vector_store %arg15[%c0_42, %c0_43], %71 {strides = array<i32>} : memref<128x16xf32, #tpu.memory_space<vmem>>, vector<128x16xf32>,
    return
  }
  func.func @transform_0(%arg0: i32) -> (i32, i32) {
    %c0_i32 = arith.constant 0 : i32
    %c0_i32_0 = arith.constant 0 : i32
    return %arg0, %c0_i32 : i32, i32
  }
  func.func @transform_1(%arg0: i32) -> (i32, i32) {
    %c0_i32 = arith.constant 0 : i32
    %c0_i32_0 = arith.constant 0 : i32
    %c0_i32_1 = arith.constant 0 : i32
    return %c0_i32, %c0_i32_0 : i32, i32
  }
  func.func @transform_2(%arg0: i32) -> (i32, i32) {
    %c0_i32 = arith.constant 0 : i32
    %c0_i32_0 = arith.constant 0 : i32
    %c0_i32_1 = arith.constant 0 : i32
    return %c0_i32, %c0_i32_0 : i32, i32
  }
  func.func @transform_3(%arg0: i32) -> (i32, i32) {
    %c0_i32 = arith.constant 0 : i32
    %c0_i32_0 = arith.constant 0 : i32
    %c0_i32_1 = arith.constant 0 : i32
    return %c0_i32, %c0_i32_0 : i32, i32
  }
  func.func @transform_4(%arg0: i32) -> (i32, i32) {
    %c0_i32 = arith.constant 0 : i32
    %c0_i32_0 = arith.constant 0 : i32
    %c0_i32_1 = arith.constant 0 : i32
    return %c0_i32, %c0_i32_0 : i32, i32
  }
  func.func @transform_5(%arg0: i32) -> (i32, i32) {
    %c0_i32 = arith.constant 0 : i32
    %c0_i32_0 = arith.constant 0 : i32
    %c0_i32_1 = arith.constant 0 : i32
    return %c0_i32, %c0_i32_0 : i32, i32
  }
  func.func @transform_6(%arg0: i32) -> (i32, i32) {
    %c0_i32 = arith.constant 0 : i32
    %c0_i32_0 = arith.constant 0 : i32
    %c0_i32_1 = arith.constant 0 : i32
    return %c0_i32, %c0_i32_0 : i32, i32
  }
  func.func @transform_7(%arg0: i32) -> (i32, i32) {
    %c0_i32 = arith.constant 0 : i32
    %c0_i32_0 = arith.constant 0 : i32
    %c0_i32_1 = arith.constant 0 : i32
    return %c0_i32, %c0_i32_0 : i32, i32
  }
  func.func @transform_8(%arg0: i32) -> (i32, i32) {
    %c0_i32 = arith.constant 0 : i32
    %c0_i32_0 = arith.constant 0 : i32
    %c0_i32_1 = arith.constant 0 : i32
    return %c0_i32, %c0_i32_0 : i32, i32
  }
  func.func @transform_9(%arg0: i32) -> (i32, i32) {
    %c0_i32 = arith.constant 0 : i32
    %c0_i32_0 = arith.constant 0 : i32
    %c0_i32_1 = arith.constant 0 : i32
    return %c0_i32, %c0_i32_0 : i32, i32
  }
  func.func @transform_10(%arg0: i32) -> (i32, i32) {
    %c0_i32 = arith.constant 0 : i32
    %c0_i32_0 = arith.constant 0 : i32
    %c0_i32_1 = arith.constant 0 : i32
    return %c0_i32, %c0_i32_0 : i32, i32
  }
  func.func @transform_11(%arg0: i32) -> (i32, i32) {
    %c0_i32 = arith.constant 0 : i32
    %c0_i32_0 = arith.constant 0 : i32
    %c0_i32_1 = arith.constant 0 : i32
    return %c0_i32, %c0_i32_0 : i32, i32
  }
  func.func @transform_12(%arg0: i32) -> (i32, i32) {
    %c0_i32 = arith.constant 0 : i32
    %c0_i32_0 = arith.constant 0 : i32
    %c0_i32_1 = arith.constant 0 : i32
    return %c0_i32, %c0_i32_0 : i32, i32
  }
  func.func @transform_13(%arg0: i32) -> (i32, i32) {
    %c0_i32 = arith.constant 0 : i32
    %c0_i32_0 = arith.constant 0 : i32
    %c0_i32_1 = arith.constant 0 : i32
    return %c0_i32, %c0_i32_0 : i32, i32
  }
  func.func @transform_14(%arg0: i32) -> (i32, i32) {
    %c0_i32 = arith.constant 0 : i32
    %c0_i32_0 = arith.constant 0 : i32
    return %arg0, %c0_i32 : i32, i32
  }
}

</mosaic_0001>

<llo_original>
// kernel: tpu_custom_call.1
$region0: #{tpu_custom_call.1}
  #allocation0 [shape = 'u32[]', space=smem, size = 0x4, offset = 0x4, fixed_abs, tag = 'smem constant byte address 0x4 - core index']
  #allocation1 [shape = 'u32[144,128]{1,0:T(1,128)}', space=vmem, size = 0x12000, scoped, tag = 'internal scratch']
  %s0 = inlined_call_operand.vmem [shape: f32[128,16], index: 0, kind: input, shape index: {}]
  %s1 = inlined_call_operand.vmem [shape: f32[16,32], index: 1, kind: input, shape index: {}]
  %s2 = inlined_call_operand.vmem [shape: f32[1,32], index: 2, kind: input, shape index: {}]
  %s3 = inlined_call_operand.vmem [shape: f32[32,32], index: 3, kind: input, shape index: {}]
  %s4 = inlined_call_operand.vmem [shape: f32[1,32], index: 4, kind: input, shape index: {}]
  %s5 = inlined_call_operand.vmem [shape: f32[32,9], index: 5, kind: input, shape index: {}]
  %s6 = inlined_call_operand.vmem [shape: f32[1,9], index: 6, kind: input, shape index: {}]
  %s7 = inlined_call_operand.vmem [shape: f32[1,8], index: 7, kind: input, shape index: {}]
  %s8 = inlined_call_operand.vmem [shape: f32[1,8], index: 8, kind: input, shape index: {}]
  %s9 = inlined_call_operand.vmem [shape: f32[1,8], index: 9, kind: input, shape index: {}]
  %s10 = inlined_call_operand.vmem [shape: f32[8,32], index: 10, kind: input, shape index: {}]
  %s11 = inlined_call_operand.vmem [shape: f32[1,32], index: 11, kind: input, shape index: {}]
  %s12 = inlined_call_operand.vmem [shape: f32[32,16], index: 12, kind: input, shape index: {}]
  %s13 = inlined_call_operand.vmem [shape: f32[1,16], index: 13, kind: input, shape index: {}]
  %s14 = inlined_call_operand.vmem [shape: f32[128,16], index: 14, kind: output, shape index: {}]
  %s15 = sld [smem:[#allocation0]]
  $region66: #{tpu_custom_call.1} parent=0
    _
  %s17 = ssub.s32 1, %s15
  %s18 = scalar_select 0, %s17, %s15
  // Predicated region
  $region2: #{tpu_custom_call.1} parent=0 // pred_check
    _
  $region3: #{tpu_custom_call.1} parent=0 // pred_check_branch
    %20 = sbr.rel (0) target = $region5
  $region4: #{tpu_custom_call.1} parent=0 // pred_region
    _
  $region5: #{tpu_custom_call.1} parent=0 // pred_fallthru
    _
  // Predicated region
  $region6: #{tpu_custom_call.1} parent=0 // pred_check
    _
  $region7: #{tpu_custom_call.1} parent=0 // pred_check_branch
    %22 = sbr.rel (0) target = $region9
  $region8: #{tpu_custom_call.1} parent=0 // pred_region
    _
  $region9: #{tpu_custom_call.1} parent=0 // pred_fallthru
    _
  // Predicated region
  $region10: #{tpu_custom_call.1} parent=0 // pred_check
    _
  $region11: #{tpu_custom_call.1} parent=0 // pred_check_branch
    %24 = sbr.rel (0) target = $region13
  $region12: #{tpu_custom_call.1} parent=0 // pred_region
    _
  $region13: #{tpu_custom_call.1} parent=0 // pred_fallthru
    _
  // Predicated region
  $region14: #{tpu_custom_call.1} parent=0 // pred_check
    _
  $region15: #{tpu_custom_call.1} parent=0 // pred_check_branch
    %26 = sbr.rel (0) target = $region17
  $region16: #{tpu_custom_call.1} parent=0 // pred_region
    _
  $region17: #{tpu_custom_call.1} parent=0 // pred_fallthru
    _
  // Predicated region
  $region18: #{tpu_custom_call.1} parent=0 // pred_check
    _
  $region19: #{tpu_custom_call.1} parent=0 // pred_check_branch
    %28 = sbr.rel (0) target = $region21
  $region20: #{tpu_custom_call.1} parent=0 // pred_region
    _
  $region21: #{tpu_custom_call.1} parent=0 // pred_fallthru
    _
  // Predicated region
  $region22: #{tpu_custom_call.1} parent=0 // pred_check
    _
  $region23: #{tpu_custom_call.1} parent=0 // pred_check_branch
    %30 = sbr.rel (0) target = $region25
  $region24: #{tpu_custom_call.1} parent=0 // pred_region
    _
  $region25: #{tpu_custom_call.1} parent=0 // pred_fallthru
    _
  // Predicated region
  $region26: #{tpu_custom_call.1} parent=0 // pred_check
    _
  $region27: #{tpu_custom_call.1} parent=0 // pred_check_branch
    %32 = sbr.rel (0) target = $region29
  $region28: #{tpu_custom_call.1} parent=0 // pred_region
    _
  $region29: #{tpu_custom_call.1} parent=0 // pred_fallthru
    _
  // Predicated region
  $region30: #{tpu_custom_call.1} parent=0 // pred_check
    _
  $region31: #{tpu_custom_call.1} parent=0 // pred_check_branch
    %34 = sbr.rel (0) target = $region33
  $region32: #{tpu_custom_call.1} parent=0 // pred_region
    _
  $region33: #{tpu_custom_call.1} parent=0 // pred_fallthru
    _
  // Predicated region
  $region34: #{tpu_custom_call.1} parent=0 // pred_check
    _
  $region35: #{tpu_custom_call.1} parent=0 // pred_check_branch
    %36 = sbr.rel (0) target = $region37
  $region36: #{tpu_custom_call.1} parent=0 // pred_region
    _
  $region37: #{tpu_custom_call.1} parent=0 // pred_fallthru
    _
  // Predicated region
  $region38: #{tpu_custom_call.1} parent=0 // pred_check
    _
  $region39: #{tpu_custom_call.1} parent=0 // pred_check_branch
    %38 = sbr.rel (0) target = $region41
  $region40: #{tpu_custom_call.1} parent=0 // pred_region
    _
  $region41: #{tpu_custom_call.1} parent=0 // pred_fallthru
    _
  // Predicated region
  $region42: #{tpu_custom_call.1} parent=0 // pred_check
    _
  $region43: #{tpu_custom_call.1} parent=0 // pred_check_branch
    %40 = sbr.rel (0) target = $region45
  $region44: #{tpu_custom_call.1} parent=0 // pred_region
    _
  $region45: #{tpu_custom_call.1} parent=0 // pred_fallthru
    _
  // Predicated region
  $region46: #{tpu_custom_call.1} parent=0 // pred_check
    _
  $region47: #{tpu_custom_call.1} parent=0 // pred_check_branch
    %42 = sbr.rel (0) target = $region49
  $region48: #{tpu_custom_call.1} parent=0 // pred_region
    _
  $region49: #{tpu_custom_call.1} parent=0 // pred_fallthru
    _
  // Predicated region
  $region50: #{tpu_custom_call.1} parent=0 // pred_check
    _
  $region51: #{tpu_custom_call.1} parent=0 // pred_check_branch
    %44 = sbr.rel (0) target = $region53
  $region52: #{tpu_custom_call.1} parent=0 // pred_region
    _
  $region53: #{tpu_custom_call.1} parent=0 // pred_fallthru
    _
  // Predicated region
  $region54: #{tpu_custom_call.1} parent=0 // pred_check
    _
  $region55: #{tpu_custom_call.1} parent=0 // pred_check_branch
    %46 = sbr.rel (0) target = $region57
  $region56: #{tpu_custom_call.1} parent=0 // pred_region
    _
  $region57: #{tpu_custom_call.1} parent=0 // pred_fallthru
    _
  %v47 = vld [vmem:[%s0] sm:$0xff]
  %v48 = vld [vmem:[%s0 + $0x8] sm:$0xff]
  %v49 = vld [vmem:[%s0 + $0x10] sm:$0xff]
  %v50 = vld [vmem:[%s0 + $0x18] sm:$0xff]
  %v51 = vld [vmem:[%s0 + $0x20] sm:$0xff]
  %v52 = vld [vmem:[%s0 + $0x28] sm:$0xff]
  %v53 = vld [vmem:[%s0 + $0x30] sm:$0xff]
  %v54 = vld [vmem:[%s0 + $0x38] sm:$0xff]
  %v55 = vld [vmem:[%s0 + $0x40] sm:$0xff]
  %v56 = vld [vmem:[%s0 + $0x48] sm:$0xff]
  %v57 = vld [vmem:[%s0 + $0x50] sm:$0xff]
  %v58 = vld [vmem:[%s0 + $0x58] sm:$0xff]
  %v59 = vld [vmem:[%s0 + $0x60] sm:$0xff]
  %v60 = vld [vmem:[%s0 + $0x68] sm:$0xff]
  %v61 = vld [vmem:[%s0 + $0x70] sm:$0xff]
  %v62 = vld [vmem:[%s0 + $0x78] sm:$0xff]
  %v63 = vld [vmem:[%s1] sm:$0xff]
  %v64 = vld [vmem:[%s1 + $0x8] sm:$0xff]
  %v65 = vld [vmem:[%s2] sm:$0x1]
  %v67 = vlaneseq
  %v68 = vshrl.u32 %v67, 7
  %v69 = vsub.s32 0, %v68
  %v70 = vrot.slane %v65, %v69
  %vm72 = vcmask 130048
  %v74 = vsel %vm72, %v47, 0
  %v77 = vsel %vm72, %v48, 0
  %v80 = vsel %vm72, %v49, 0
  %v83 = vsel %vm72, %v50, 0
  %v86 = vsel %vm72, %v51, 0
  %v89 = vsel %vm72, %v52, 0
  %v92 = vsel %vm72, %v53, 0
  %v95 = vsel %vm72, %v54, 0
  %v98 = vsel %vm72, %v55, 0
  %v101 = vsel %vm72, %v56, 0
  %v104 = vsel %vm72, %v57, 0
  %v107 = vsel %vm72, %v58, 0
  %v110 = vsel %vm72, %v59, 0
  %v113 = vsel %vm72, %v60, 0
  %v116 = vsel %vm72, %v61, 0
  %v119 = vsel %vm72, %v62, 0
  %121 = vmatprep.subr.mxu0 0.0
  %122 = vmatpush1.msra.mxu0 %v63
  %123 = vmatprep.subr.mxu0 0.0
  %124 = vmatpush1.msra.mxu0 %v64
  %125 = vmatprep.subr.mxu0 0.0
  %126 = vmatpush1.msra.mxu0 0.0
  %127 = vmatprep.subr.mxu0 0.0
  %128 = vmatpush1.msra.mxu0 0.0
  %129 = vmatprep.subr.mxu0 0.0
  %130 = vmatpush1.msra.mxu0 0.0
  %131 = vmatprep.subr.mxu0 0.0
  %132 = vmatpush1.msra.mxu0 0.0
  %133 = vmatprep.subr.mxu0 0.0
  %134 = vmatpush1.msra.mxu0 0.0
  %135 = vmatprep.subr.mxu0 0.0
  %136 = vmatpush1.msra.mxu0 0.0
  %137 = vmatprep.subr.mxu0 0.0
  %138 = vmatpush1.msra.mxu0 0.0
  %139 = vmatprep.subr.mxu0 0.0
  %140 = vmatpush1.msra.mxu0 0.0
  %141 = vmatprep.subr.mxu0 0.0
  %142 = vmatpush1.msra.mxu0 0.0
  %143 = vmatprep.subr.mxu0 0.0
  %144 = vmatpush1.msra.mxu0 0.0
  %145 = vmatprep.subr.mxu0 0.0
  %146 = vmatpush1.msra.mxu0 0.0
  %147 = vmatprep.subr.mxu0 0.0
  %148 = vmatpush1.msra.mxu0 0.0
  %149 = vmatprep.subr.mxu0 0.0
  %150 = vmatpush1.msra.mxu0 0.0
  %151 = vmatprep.subr.mxu0 0.0
  %152 = vmatpush1.msra.mxu0 0.0
  %153 = vmatprep.subr.mxu0 0.0
  %154 = vmatpush1.msra.mxu0 0.0
  %155 = vmatprep.subr.mxu0 0.0
  %156 = vmatpush1.msra.mxu0 0.0
  %157 = vmatprep.subr.mxu0 0.0
  %158 = vmatpush1.msra.mxu0 0.0
  %159 = vmatprep.subr.mxu0 0.0
  %160 = vmatpush1.msra.mxu0 0.0
  %161 = vmatprep.subr.mxu0 0.0
  %162 = vmatpush1.msra.mxu0 0.0
  %163 = vmatprep.subr.mxu0 0.0
  %164 = vmatpush1.msra.mxu0 0.0
  %165 = vmatprep.subr.mxu0 0.0
  %166 = vmatpush1.msra.mxu0 0.0
  %167 = vmatprep.subr.mxu0 0.0
  %168 = vmatpush1.msra.mxu0 0.0
  %169 = vmatprep.subr.mxu0 0.0
  %170 = vmatpush1.msra.mxu0 0.0
  %171 = vmatprep.subr.mxu0 0.0
  %172 = vmatpush1.msra.mxu0 0.0
  %173 = vmatprep.subr.mxu0 0.0
  %174 = vmatpush1.msra.mxu0 0.0
  %175 = vmatprep.subr.mxu0 0.0
  %176 = vmatpush1.msra.mxu0 0.0
  %177 = vmatprep.subr.mxu0 0.0
  %178 = vmatpush1.msra.mxu0 0.0
  %179 = vmatprep.subr.mxu0 0.0
  %180 = vmatpush1.msra.mxu0 0.0
  %181 = vmatprep.subr.mxu0 0.0
  %182 = vmatpush1.msra.mxu0 0.0
  %183 = vmatprep.subr.mxu0 0.0
  %184 = vmatpush1.msra.mxu0 0.0
  %185 = vmatprep.mubr.f32.mxu0 0.0
  %186 = vmatmul.mubr.f32.gmra.mrb[0].mxu0 %v74
  %v187 = vpop.f32.mrb[0].mxu0
  %v188 = vadd.f32 %v70, %v187
  %v189 = vpop.f32.mrb[0].mxu0
  %190 = vmatprep.mubr.f32.mxu0 0.0
  %191 = vmatmul.mubr.f32.gmra.mrb[0].mxu0 %v77
  %v192 = vpop.f32.mrb[0].mxu0
  %v193 = vadd.f32 %v70, %v192
  %v194 = vpop.f32.mrb[0].mxu0
  %195 = vmatprep.mubr.f32.mxu0 0.0
  %196 = vmatmul.mubr.f32.gmra.mrb[0].mxu0 %v80
  %v197 = vpop.f32.mrb[0].mxu0
  %v198 = vadd.f32 %v70, %v197
  %v199 = vpop.f32.mrb[0].mxu0
  %200 = vmatprep.mubr.f32.mxu0 0.0
  %201 = vmatmul.mubr.f32.gmra.mrb[0].mxu0 %v83
  %v202 = vpop.f32.mrb[0].mxu0
  %v203 = vadd.f32 %v70, %v202
  %v204 = vpop.f32.mrb[0].mxu0
  %205 = vmatprep.mubr.f32.mxu0 0.0
  %206 = vmatmul.mubr.f32.gmra.mrb[0].mxu0 %v86
  %v207 = vpop.f32.mrb[0].mxu0
  %v208 = vadd.f32 %v70, %v207
  %v209 = vpop.f32.mrb[0].mxu0
  %210 = vmatprep.mubr.f32.mxu0 0.0
  %211 = vmatmul.mubr.f32.gmra.mrb[0].mxu0 %v89
  %v212 = vpop.f32.mrb[0].mxu0
  %v213 = vadd.f32 %v70, %v212
  %v214 = vpop.f32.mrb[0].mxu0
  %215 = vmatprep.mubr.f32.mxu0 0.0
  %216 = vmatmul.mubr.f32.gmra.mrb[0].mxu0 %v92
  %v217 = vpop.f32.mrb[0].mxu0
  %v218 = vadd.f32 %v70, %v217
  %v219 = vpop.f32.mrb[0].mxu0
  %220 = vmatprep.mubr.f32.mxu0 0.0
  %221 = vmatmul.mubr.f32.gmra.mrb[0].mxu0 %v95
  %v222 = vpop.f32.mrb[0].mxu0
  %v223 = vadd.f32 %v70, %v222
  %v224 = vpop.f32.mrb[0].mxu0
  %225 = vmatprep.mubr.f32.mxu0 0.0
  %226 = vmatmul.mubr.f32.gmra.mrb[0].mxu0 %v98
  %v227 = vpop.f32.mrb[0].mxu0
  %v228 = vadd.f32 %v70, %v227
  %v229 = vpop.f32.mrb[0].mxu0
  %230 = vmatprep.mubr.f32.mxu0 0.0
  %231 = vmatmul.mubr.f32.gmra.mrb[0].mxu0 %v101
  %v232 = vpop.f32.mrb[0].mxu0
  %v233 = vadd.f32 %v70, %v232
  %v234 = vpop.f32.mrb[0].mxu0
  %235 = vmatprep.mubr.f32.mxu0 0.0
  %236 = vmatmul.mubr.f32.gmra.mrb[0].mxu0 %v104
  %v237 = vpop.f32.mrb[0].mxu0
  %v238 = vadd.f32 %v70, %v237
  %v239 = vpop.f32.mrb[0].mxu0
  %240 = vmatprep.mubr.f32.mxu0 0.0
  %241 = vmatmul.mubr.f32.gmra.mrb[0].mxu0 %v107
  %v242 = vpop.f32.mrb[0].mxu0
  %v243 = vadd.f32 %v70, %v242
  %v244 = vpop.f32.mrb[0].mxu0
  %245 = vmatprep.mubr.f32.mxu0 0.0
  %246 = vmatmul.mubr.f32.gmra.mrb[0].mxu0 %v110
  %v247 = vpop.f32.mrb[0].mxu0
  %v248 = vadd.f32 %v70, %v247
  %v249 = vpop.f32.mrb[0].mxu0
  %250 = vmatprep.mubr.f32.mxu0 0.0
  %251 = vmatmul.mubr.f32.gmra.mrb[0].mxu0 %v113
  %v252 = vpop.f32.mrb[0].mxu0
  %v253 = vadd.f32 %v70, %v252
  %v254 = vpop.f32.mrb[0].mxu0
  %255 = vmatprep.mubr.f32.mxu0 0.0
  %256 = vmatmul.mubr.f32.gmra.mrb[0].mxu0 %v116
  %v257 = vpop.f32.mrb[0].mxu0
  %v258 = vadd.f32 %v70, %v257
  %v259 = vpop.f32.mrb[0].mxu0
  %260 = vmatprep.mubr.f32.mxu0 0.0
  %261 = vmatmul.mubr.f32.gmra.mrb[0].mxu0 %v119
  %v262 = vpop.f32.mrb[0].mxu0
  %v263 = vadd.f32 %v70, %v262
  %v264 = vpop.f32.mrb[0].mxu0
  %265 = vdwg.mxu0
  %v266 = vmax.f32 %v188, 0.0
  %v267 = vmax.f32 %v193, 0.0
  %v268 = vmax.f32 %v198, 0.0
  %v269 = vmax.f32 %v203, 0.0
  %v270 = vmax.f32 %v208, 0.0
  %v271 = vmax.f32 %v213, 0.0
  %v272 = vmax.f32 %v218, 0.0
  %v273 = vmax.f32 %v223, 0.0
  %v274 = vmax.f32 %v228, 0.0
  %v275 = vmax.f32 %v233, 0.0
  %v276 = vmax.f32 %v238, 0.0
  %v277 = vmax.f32 %v243, 0.0
  %v278 = vmax.f32 %v248, 0.0
  %v279 = vmax.f32 %v253, 0.0
  %v280 = vmax.f32 %v258, 0.0
  %v281 = vmax.f32 %v263, 0.0
  %v282 = vld [vmem:[%s3] sm:$0xff]
  %v283 = vld [vmem:[%s3 + $0x8] sm:$0xff]
  %v284 = vld [vmem:[%s3 + $0x10] sm:$0xff]
  %v285 = vld [vmem:[%s3 + $0x18] sm:$0xff]
  %v286 = vld [vmem:[%s4] sm:$0x1]
  %v288 = vlaneseq
  %v289 = vshrl.u32 %v288, 7
  %v290 = vsub.s32 0, %v289
  %v291 = vrot.slane %v286, %v290
  %vm293 = vcmask 261120
  %v295 = vsel %vm293, %v266, 0
  %v298 = vsel %vm293, %v267, 0
  %v301 = vsel %vm293, %v268, 0
  %v304 = vsel %vm293, %v269, 0
  %v307 = vsel %vm293, %v270, 0
  %v310 = vsel %vm293, %v271, 0
  %v313 = vsel %vm293, %v272, 0
  %v316 = vsel %vm293, %v273, 0
  %v319 = vsel %vm293, %v274, 0
  %v322 = vsel %vm293, %v275, 0
  %v325 = vsel %vm293, %v276, 0
  %v328 = vsel %vm293, %v277, 0
  %v331 = vsel %vm293, %v278, 0
  %v334 = vsel %vm293, %v279, 0
  %v337 = vsel %vm293, %v280, 0
  %v340 = vsel %vm293, %v281, 0
  %342 = vmatprep.subr.mxu0 0.0
  %343 = vmatpush1.msra.mxu0 %v282
  %344 = vmatprep.subr.mxu0 0.0
  %345 = vmatpush1.msra.mxu0 %v283
  %346 = vmatprep.subr.mxu0 0.0
  %347 = vmatpush1.msra.mxu0 %v284
  %348 = vmatprep.subr.mxu0 0.0
  %349 = vmatpush1.msra.mxu0 %v285
  %350 = vmatprep.subr.mxu0 0.0
  %351 = vmatpush1.msra.mxu0 0.0
  %352 = vmatprep.subr.mxu0 0.0
  %353 = vmatpush1.msra.mxu0 0.0
  %354 = vmatprep.subr.mxu0 0.0
  %355 = vmatpush1.msra.mxu0 0.0
  %356 = vmatprep.subr.mxu0 0.0
  %357 = vmatpush1.msra.mxu0 0.0
  %358 = vmatprep.subr.mxu0 0.0
  %359 = vmatpush1.msra.mxu0 0.0
  %360 = vmatprep.subr.mxu0 0.0
  %361 = vmatpush1.msra.mxu0 0.0
  %362 = vmatprep.subr.mxu0 0.0
  %363 = vmatpush1.msra.mxu0 0.0
  %364 = vmatprep.subr.mxu0 0.0
  %365 = vmatpush1.msra.mxu0 0.0
  %366 = vmatprep.subr.mxu0 0.0
  %367 = vmatpush1.msra.mxu0 0.0
  %368 = vmatprep.subr.mxu0 0.0
  %369 = vmatpush1.msra.mxu0 0.0
  %370 = vmatprep.subr.mxu0 0.0
  %371 = vmatpush1.msra.mxu0 0.0
  %372 = vmatprep.subr.mxu0 0.0
  %373 = vmatpush1.msra.mxu0 0.0
  %374 = vmatprep.subr.mxu0 0.0
  %375 = vmatpush1.msra.mxu0 0.0
  %376 = vmatprep.subr.mxu0 0.0
  %377 = vmatpush1.msra.mxu0 0.0
  %378 = vmatprep.subr.mxu0 0.0
  %379 = vmatpush1.msra.mxu0 0.0
  %380 = vmatprep.subr.mxu0 0.0
  %381 = vmatpush1.msra.mxu0 0.0
  %382 = vmatprep.subr.mxu0 0.0
  %383 = vmatpush1.msra.mxu0 0.0
  %384 = vmatprep.subr.mxu0 0.0
  %385 = vmatpush1.msra.mxu0 0.0
  %386 = vmatprep.subr.mxu0 0.0
  %387 = vmatpush1.msra.mxu0 0.0
  %388 = vmatprep.subr.mxu0 0.0
  %389 = vmatpush1.msra.mxu0 0.0
  %390 = vmatprep.subr.mxu0 0.0
  %391 = vmatpush1.msra.mxu0 0.0
  %392 = vmatprep.subr.mxu0 0.0
  %393 = vmatpush1.msra.mxu0 0.0
  %394 = vmatprep.subr.mxu0 0.0
  %395 = vmatpush1.msra.mxu0 0.0
  %396 = vmatprep.subr.mxu0 0.0
  %397 = vmatpush1.msra.mxu0 0.0
  %398 = vmatprep.subr.mxu0 0.0
  %399 = vmatpush1.msra.mxu0 0.0
  %400 = vmatprep.subr.mxu0 0.0
  %401 = vmatpush1.msra.mxu0 0.0
  %402 = vmatprep.subr.mxu0 0.0
  %403 = vmatpush1.msra.mxu0 0.0
  %404 = vmatprep.subr.mxu0 0.0
  %405 = vmatpush1.msra.mxu0 0.0
  %406 = vmatprep.mubr.f32.mxu0 0.0
  %407 = vmatmul.mubr.f32.gmra.mrb[0].mxu0 %v295
  %v408 = vpop.f32.mrb[0].mxu0
  %v409 = vadd.f32 %v291, %v408
  %v410 = vpop.f32.mrb[0].mxu0
  %411 = vmatprep.mubr.f32.mxu0 0.0
  %412 = vmatmul.mubr.f32.gmra.mrb[0].mxu0 %v298
  %v413 = vpop.f32.mrb[0].mxu0
  %v414 = vadd.f32 %v291, %v413
  %v415 = vpop.f32.mrb[0].mxu0
  %416 = vmatprep.mubr.f32.mxu0 0.0
  %417 = vmatmul.mubr.f32.gmra.mrb[0].mxu0 %v301
  %v418 = vpop.f32.mrb[0].mxu0
  %v419 = vadd.f32 %v291, %v418
  %v420 = vpop.f32.mrb[0].mxu0
  %421 = vmatprep.mubr.f32.mxu0 0.0
  %422 = vmatmul.mubr.f32.gmra.mrb[0].mxu0 %v304
  %v423 = vpop.f32.mrb[0].mxu0
  %v424 = vadd.f32 %v291, %v423
  %v425 = vpop.f32.mrb[0].mxu0
  %426 = vmatprep.mubr.f32.mxu0 0.0
  %427 = vmatmul.mubr.f32.gmra.mrb[0].mxu0 %v307
  %v428 = vpop.f32.mrb[0].mxu0
  %v429 = vadd.f32 %v291, %v428
  %v430 = vpop.f32.mrb[0].mxu0
  %431 = vmatprep.mubr.f32.mxu0 0.0
  %432 = vmatmul.mubr.f32.gmra.mrb[0].mxu0 %v310
  %v433 = vpop.f32.mrb[0].mxu0
  %v434 = vadd.f32 %v291, %v433
  %v435 = vpop.f32.mrb[0].mxu0
  %436 = vmatprep.mubr.f32.mxu0 0.0
  %437 = vmatmul.mubr.f32.gmra.mrb[0].mxu0 %v313
  %v438 = vpop.f32.mrb[0].mxu0
  %v439 = vadd.f32 %v291, %v438
  %v440 = vpop.f32.mrb[0].mxu0
  %441 = vmatprep.mubr.f32.mxu0 0.0
  %442 = vmatmul.mubr.f32.gmra.mrb[0].mxu0 %v316
  %v443 = vpop.f32.mrb[0].mxu0
  %v444 = vadd.f32 %v291, %v443
  %v445 = vpop.f32.mrb[0].mxu0
  %446 = vmatprep.mubr.f32.mxu0 0.0
  %447 = vmatmul.mubr.f32.gmra.mrb[0].mxu0 %v319
  %v448 = vpop.f32.mrb[0].mxu0
  %v449 = vadd.f32 %v291, %v448
  %v450 = vpop.f32.mrb[0].mxu0
  %451 = vmatprep.mubr.f32.mxu0 0.0
  %452 = vmatmul.mubr.f32.gmra.mrb[0].mxu0 %v322
  %v453 = vpop.f32.mrb[0].mxu0
  %v454 = vadd.f32 %v291, %v453
  %v455 = vpop.f32.mrb[0].mxu0
  %456 = vmatprep.mubr.f32.mxu0 0.0
  %457 = vmatmul.mubr.f32.gmra.mrb[0].mxu0 %v325
  %v458 = vpop.f32.mrb[0].mxu0
  %v459 = vadd.f32 %v291, %v458
  %v460 = vpop.f32.mrb[0].mxu0
  %461 = vmatprep.mubr.f32.mxu0 0.0
  %462 = vmatmul.mubr.f32.gmra.mrb[0].mxu0 %v328
  %v463 = vpop.f32.mrb[0].mxu0
  %v464 = vadd.f32 %v291, %v463
  %v465 = vpop.f32.mrb[0].mxu0
  %466 = vmatprep.mubr.f32.mxu0 0.0
  %467 = vmatmul.mubr.f32.gmra.mrb[0].mxu0 %v331
  %v468 = vpop.f32.mrb[0].mxu0
  %v469 = vadd.f32 %v291, %v468
  %v470 = vpop.f32.mrb[0].mxu0
  %471 = vmatprep.mubr.f32.mxu0 0.0
  %472 = vmatmul.mubr.f32.gmra.mrb[0].mxu0 %v334
  %v473 = vpop.f32.mrb[0].mxu0
  %v474 = vadd.f32 %v291, %v473
  %v475 = vpop.f32.mrb[0].mxu0
  %476 = vmatprep.mubr.f32.mxu0 0.0
  %477 = vmatmul.mubr.f32.gmra.mrb[0].mxu0 %v337
  %v478 = vpop.f32.mrb[0].mxu0
  %v479 = vadd.f32 %v291, %v478
  %v480 = vpop.f32.mrb[0].mxu0
  %481 = vmatprep.mubr.f32.mxu0 0.0
  %482 = vmatmul.mubr.f32.gmra.mrb[0].mxu0 %v340
  %v483 = vpop.f32.mrb[0].mxu0
  %v484 = vadd.f32 %v291, %v483
  %v485 = vpop.f32.mrb[0].mxu0
  %486 = vdwg.mxu0
  %v487 = vld [vmem:[%s5] sm:$0xff]
  %v488 = vld [vmem:[%s5 + $0x8] sm:$0xff]
  %v489 = vld [vmem:[%s5 + $0x10] sm:$0xff]
  %v490 = vld [vmem:[%s5 + $0x18] sm:$0xff]
  %v491 = vld [vmem:[%s6] sm:$0x1]
  %v493 = vlaneseq
  %v494 = vshrl.u32 %v493, 7
  %v495 = vsub.s32 0, %v494
  %v496 = vrot.slane %v491, %v495
  %v499 = vsel %vm293, %v409, 0
  %v502 = vsel %vm293, %v414, 0
  %v505 = vsel %vm293, %v419, 0
  %v508 = vsel %vm293, %v424, 0
  %v511 = vsel %vm293, %v429, 0
  %v514 = vsel %vm293, %v434, 0
  %v517 = vsel %vm293, %v439, 0
  %v520 = vsel %vm293, %v444, 0
  %v523 = vsel %vm293, %v449, 0
  %v526 = vsel %vm293, %v454, 0
  %v529 = vsel %vm293, %v459, 0
  %v532 = vsel %vm293, %v464, 0
  %v535 = vsel %vm293, %v469, 0
  %v538 = vsel %vm293, %v474, 0
  %v541 = vsel %vm293, %v479, 0
  %v544 = vsel %vm293, %v484, 0
  %546 = vmatprep.subr.mxu0 0.0
  %547 = vmatpush1.msra.mxu0 %v487
  %548 = vmatprep.subr.mxu0 0.0
  %549 = vmatpush1.msra.mxu0 %v488
  %550 = vmatprep.subr.mxu0 0.0
  %551 = vmatpush1.msra.mxu0 %v489
  %552 = vmatprep.subr.mxu0 0.0
  %553 = vmatpush1.msra.mxu0 %v490
  %554 = vmatprep.subr.mxu0 0.0
  %555 = vmatpush1.msra.mxu0 0.0
  %556 = vmatprep.subr.mxu0 0.0
  %557 = vmatpush1.msra.mxu0 0.0
  %558 = vmatprep.subr.mxu0 0.0
  %559 = vmatpush1.msra.mxu0 0.0
  %560 = vmatprep.subr.mxu0 0.0
  %561 = vmatpush1.msra.mxu0 0.0
  %562 = vmatprep.subr.mxu0 0.0
  %563 = vmatpush1.msra.mxu0 0.0
  %564 = vmatprep.subr.mxu0 0.0
  %565 = vmatpush1.msra.mxu0 0.0
  %566 = vmatprep.subr.mxu0 0.0
  %567 = vmatpush1.msra.mxu0 0.0
  %568 = vmatprep.subr.mxu0 0.0
  %569 = vmatpush1.msra.mxu0 0.0
  %570 = vmatprep.subr.mxu0 0.0
  %571 = vmatpush1.msra.mxu0 0.0
  %572 = vmatprep.subr.mxu0 0.0
  %573 = vmatpush1.msra.mxu0 0.0
  %574 = vmatprep.subr.mxu0 0.0
  %575 = vmatpush1.msra.mxu0 0.0
  %576 = vmatprep.subr.mxu0 0.0
  %577 = vmatpush1.msra.mxu0 0.0
  %578 = vmatprep.subr.mxu0 0.0
  %579 = vmatpush1.msra.mxu0 0.0
  %580 = vmatprep.subr.mxu0 0.0
  %581 = vmatpush1.msra.mxu0 0.0
  %582 = vmatprep.subr.mxu0 0.0
  %583 = vmatpush1.msra.mxu0 0.0
  %584 = vmatprep.subr.mxu0 0.0
  %585 = vmatpush1.msra.mxu0 0.0
  %586 = vmatprep.subr.mxu0 0.0
  %587 = vmatpush1.msra.mxu0 0.0
  %588 = vmatprep.subr.mxu0 0.0
  %589 = vmatpush1.msra.mxu0 0.0
  %590 = vmatprep.subr.mxu0 0.0
  %591 = vmatpush1.msra.mxu0 0.0
  %592 = vmatprep.subr.mxu0 0.0
  %593 = vmatpush1.msra.mxu0 0.0
  %594 = vmatprep.subr.mxu0 0.0
  %595 = vmatpush1.msra.mxu0 0.0
  %596 = vmatprep.subr.mxu0 0.0
  %597 = vmatpush1.msra.mxu0 0.0
  %598 = vmatprep.subr.mxu0 0.0
  %599 = vmatpush1.msra.mxu0 0.0
  %600 = vmatprep.subr.mxu0 0.0
  %601 = vmatpush1.msra.mxu0 0.0
  %602 = vmatprep.subr.mxu0 0.0
  %603 = vmatpush1.msra.mxu0 0.0
  %604 = vmatprep.subr.mxu0 0.0
  %605 = vmatpush1.msra.mxu0 0.0
  %606 = vmatprep.subr.mxu0 0.0
  %607 = vmatpush1.msra.mxu0 0.0
  %608 = vmatprep.subr.mxu0 0.0
  %609 = vmatpush1.msra.mxu0 0.0
  %610 = vmatprep.mubr.f32.mxu0 0.0
  %611 = vmatmul.mubr.f32.gmra.mrb[0].mxu0 %v499
  %v612 = vpop.f32.mrb[0].mxu0
  %v613 = vadd.f32 %v496, %v612
  %v614 = vpop.f32.mrb[0].mxu0
  %615 = vmatprep.mubr.f32.mxu0 0.0
  %616 = vmatmul.mubr.f32.gmra.mrb[0].mxu0 %v502
  %v617 = vpop.f32.mrb[0].mxu0
  %v618 = vadd.f32 %v496, %v617
  %v619 = vpop.f32.mrb[0].mxu0
  %620 = vmatprep.mubr.f32.mxu0 0.0
  %621 = vmatmul.mubr.f32.gmra.mrb[0].mxu0 %v505
  %v622 = vpop.f32.mrb[0].mxu0
  %v623 = vadd.f32 %v496, %v622
  %v624 = vpop.f32.mrb[0].mxu0
  %625 = vmatprep.mubr.f32.mxu0 0.0
  %626 = vmatmul.mubr.f32.gmra.mrb[0].mxu0 %v508
  %v627 = vpop.f32.mrb[0].mxu0
  %v628 = vadd.f32 %v496, %v627
  %v629 = vpop.f32.mrb[0].mxu0
  %630 = vmatprep.mubr.f32.mxu0 0.0
  %631 = vmatmul.mubr.f32.gmra.mrb[0].mxu0 %v511
  %v632 = vpop.f32.mrb[0].mxu0
  %v633 = vadd.f32 %v496, %v632
  %v634 = vpop.f32.mrb[0].mxu0
  %635 = vmatprep.mubr.f32.mxu0 0.0
  %636 = vmatmul.mubr.f32.gmra.mrb[0].mxu0 %v514
  %v637 = vpop.f32.mrb[0].mxu0
  %v638 = vadd.f32 %v496, %v637
  %v639 = vpop.f32.mrb[0].mxu0
  %640 = vmatprep.mubr.f32.mxu0 0.0
  %641 = vmatmul.mubr.f32.gmra.mrb[0].mxu0 %v517
  %v642 = vpop.f32.mrb[0].mxu0
  %v643 = vadd.f32 %v496, %v642
  %v644 = vpop.f32.mrb[0].mxu0
  %645 = vmatprep.mubr.f32.mxu0 0.0
  %646 = vmatmul.mubr.f32.gmra.mrb[0].mxu0 %v520
  %v647 = vpop.f32.mrb[0].mxu0
  %v648 = vadd.f32 %v496, %v647
  %v649 = vpop.f32.mrb[0].mxu0
  %650 = vmatprep.mubr.f32.mxu0 0.0
  %651 = vmatmul.mubr.f32.gmra.mrb[0].mxu0 %v523
  %v652 = vpop.f32.mrb[0].mxu0
  %v653 = vadd.f32 %v496, %v652
  %v654 = vpop.f32.mrb[0].mxu0
  %655 = vmatprep.mubr.f32.mxu0 0.0
  %656 = vmatmul.mubr.f32.gmra.mrb[0].mxu0 %v526
  %v657 = vpop.f32.mrb[0].mxu0
  %v658 = vadd.f32 %v496, %v657
  %v659 = vpop.f32.mrb[0].mxu0
  %660 = vmatprep.mubr.f32.mxu0 0.0
  %661 = vmatmul.mubr.f32.gmra.mrb[0].mxu0 %v529
  %v662 = vpop.f32.mrb[0].mxu0
  %v663 = vadd.f32 %v496, %v662
  %v664 = vpop.f32.mrb[0].mxu0
  %665 = vmatprep.mubr.f32.mxu0 0.0
  %666 = vmatmul.mubr.f32.gmra.mrb[0].mxu0 %v532
  %v667 = vpop.f32.mrb[0].mxu0
  %v668 = vadd.f32 %v496, %v667
  %v669 = vpop.f32.mrb[0].mxu0
  %670 = vmatprep.mubr.f32.mxu0 0.0
  %671 = vmatmul.mubr.f32.gmra.mrb[0].mxu0 %v535
  %v672 = vpop.f32.mrb[0].mxu0
  %v673 = vadd.f32 %v496, %v672
  %v674 = vpop.f32.mrb[0].mxu0
  %675 = vmatprep.mubr.f32.mxu0 0.0
  %676 = vmatmul.mubr.f32.gmra.mrb[0].mxu0 %v538
  %v677 = vpop.f32.mrb[0].mxu0
  %v678 = vadd.f32 %v496, %v677
  %v679 = vpop.f32.mrb[0].mxu0
  %680 = vmatprep.mubr.f32.mxu0 0.0
  %681 = vmatmul.mubr.f32.gmra.mrb[0].mxu0 %v541
  %v682 = vpop.f32.mrb[0].mxu0
  %v683 = vadd.f32 %v496, %v682
  %v684 = vpop.f32.mrb[0].mxu0
  %685 = vmatprep.mubr.f32.mxu0 0.0
  %686 = vmatmul.mubr.f32.gmra.mrb[0].mxu0 %v544
  %v687 = vpop.f32.mrb[0].mxu0
  %v688 = vadd.f32 %v496, %v687
  %v689 = vpop.f32.mrb[0].mxu0
  %690 = vdwg.mxu0
  %v691 = vmul.f32 %v613, %v613
  %v692 = vmul.f32 %v618, %v618
  %v693 = vmul.f32 %v623, %v623
  %v694 = vmul.f32 %v628, %v628
  %v695 = vmul.f32 %v633, %v633
  %v696 = vmul.f32 %v638, %v638
  %v697 = vmul.f32 %v643, %v643
  %v698 = vmul.f32 %v648, %v648
  %v699 = vmul.f32 %v653, %v653
  %v700 = vmul.f32 %v658, %v658
  %v701 = vmul.f32 %v663, %v663
  %v702 = vmul.f32 %v668, %v668
  %v703 = vmul.f32 %v673, %v673
  %v704 = vmul.f32 %v678, %v678
  %v705 = vmul.f32 %v683, %v683
  %v706 = vmul.f32 %v688, %v688
  %vm707 = vcmask 64512
  %v708 = vsel %vm707, %v691, 0.0
  %709 = vadd.xlane.f32.xlu0 %v708
  %v710 = vpop.xlane.xlu0 %709
  %v711 = vsel %vm707, %v692, 0.0
  %712 = vadd.xlane.f32.xlu0 %v711
  %v713 = vpop.xlane.xlu0 %712
  %v714 = vsel %vm707, %v693, 0.0
  %715 = vadd.xlane.f32.xlu0 %v714
  %v716 = vpop.xlane.xlu0 %715
  %v717 = vsel %vm707, %v694, 0.0
  %718 = vadd.xlane.f32.xlu0 %v717
  %v719 = vpop.xlane.xlu0 %718
  %v720 = vsel %vm707, %v695, 0.0
  %721 = vadd.xlane.f32.xlu0 %v720
  %v722 = vpop.xlane.xlu0 %721
  %v723 = vsel %vm707, %v696, 0.0
  %724 = vadd.xlane.f32.xlu0 %v723
  %v725 = vpop.xlane.xlu0 %724
  %v726 = vsel %vm707, %v697, 0.0
  %727 = vadd.xlane.f32.xlu0 %v726
  %v728 = vpop.xlane.xlu0 %727
  %v729 = vsel %vm707, %v698, 0.0
  %730 = vadd.xlane.f32.xlu0 %v729
  %v731 = vpop.xlane.xlu0 %730
  %v732 = vsel %vm707, %v699, 0.0
  %733 = vadd.xlane.f32.xlu0 %v732
  %v734 = vpop.xlane.xlu0 %733
  %v735 = vsel %vm707, %v700, 0.0
  %736 = vadd.xlane.f32.xlu0 %v735
  %v737 = vpop.xlane.xlu0 %736
  %v738 = vsel %vm707, %v701, 0.0
  %739 = vadd.xlane.f32.xlu0 %v738
  %v740 = vpop.xlane.xlu0 %739
  %v741 = vsel %vm707, %v702, 0.0
  %742 = vadd.xlane.f32.xlu0 %v741
  %v743 = vpop.xlane.xlu0 %742
  %v744 = vsel %vm707, %v703, 0.0
  %745 = vadd.xlane.f32.xlu0 %v744
  %v746 = vpop.xlane.xlu0 %745
  %v747 = vsel %vm707, %v704, 0.0
  %748 = vadd.xlane.f32.xlu0 %v747
  %v749 = vpop.xlane.xlu0 %748
  %v750 = vsel %vm707, %v705, 0.0
  %751 = vadd.xlane.f32.xlu0 %v750
  %v752 = vpop.xlane.xlu0 %751
  %v753 = vsel %vm707, %v706, 0.0
  %754 = vadd.xlane.f32.xlu0 %v753
  %v755 = vpop.xlane.xlu0 %754
  %v756 = vadd.f32 %v710, 1e-12
  %v757 = vadd.f32 %v713, 1e-12
  %v758 = vadd.f32 %v716, 1e-12
  %v759 = vadd.f32 %v719, 1e-12
  %v760 = vadd.f32 %v722, 1e-12
  %v761 = vadd.f32 %v725, 1e-12
  %v762 = vadd.f32 %v728, 1e-12
  %v763 = vadd.f32 %v731, 1e-12
  %v764 = vadd.f32 %v734, 1e-12
  %v765 = vadd.f32 %v737, 1e-12
  %v766 = vadd.f32 %v740, 1e-12
  %v767 = vadd.f32 %v743, 1e-12
  %v768 = vadd.f32 %v746, 1e-12
  %v769 = vadd.f32 %v749, 1e-12
  %v770 = vadd.f32 %v752, 1e-12
  %v771 = vadd.f32 %v755, 1e-12
  %v772 = vrsqrt.pop %v756
  %v773 = vrsqrt.pop %v757
  %v774 = vrsqrt.pop %v758
  %v775 = vrsqrt.pop %v759
  %v776 = vrsqrt.pop %v760
  %v777 = vrsqrt.pop %v761
  %v778 = vrsqrt.pop %v762
  %v779 = vrsqrt.pop %v763
  %v780 = vrsqrt.pop %v764
  %v781 = vrsqrt.pop %v765
  %v782 = vrsqrt.pop %v766
  %v783 = vrsqrt.pop %v767
  %v784 = vrsqrt.pop %v768
  %v785 = vrsqrt.pop %v769
  %v786 = vrsqrt.pop %v770
  %v787 = vrsqrt.pop %v771
  %v788 = vmul.f32 %v613, %v772
  %v789 = vmul.f32 %v618, %v773
  %v790 = vmul.f32 %v623, %v774
  %v791 = vmul.f32 %v628, %v775
  %v792 = vmul.f32 %v633, %v776
  %v793 = vmul.f32 %v638, %v777
  %v794 = vmul.f32 %v643, %v778
  %v795 = vmul.f32 %v648, %v779
  %v796 = vmul.f32 %v653, %v780
  %v797 = vmul.f32 %v658, %v781
  %v798 = vmul.f32 %v663, %v782
  %v799 = vmul.f32 %v668, %v783
  %v800 = vmul.f32 %v673, %v784
  %v801 = vmul.f32 %v678, %v785
  %v802 = vmul.f32 %v683, %v786
  %v803 = vmul.f32 %v688, %v787
  %v804 = vld [vmem:[%s7] sm:$0x1]
  %v805 = vld [vmem:[%s8] sm:$0x1]
  %v806 = vld [vmem:[%s9] sm:$0x1]
  %v807 = vand.u32 2147483647, %v788
  %v808 = vand.u32 2147483647, %v789
  %v809 = vand.u32 2147483647, %v790
  %v810 = vand.u32 2147483647, %v791
  %v811 = vand.u32 2147483647, %v792
  %v812 = vand.u32 2147483647, %v793
  %v813 = vand.u32 2147483647, %v794
  %v814 = vand.u32 2147483647, %v795
  %v815 = vand.u32 2147483647, %v796
  %v816 = vand.u32 2147483647, %v797
  %v817 = vand.u32 2147483647, %v798
  %v818 = vand.u32 2147483647, %v799
  %v819 = vand.u32 2147483647, %v800
  %v820 = vand.u32 2147483647, %v801
  %v821 = vand.u32 2147483647, %v802
  %v822 = vand.u32 2147483647, %v803
  %vm823 = vcmp.gt.f32.partialorder %v807, 1e-08
  %vm824 = vcmp.gt.f32.partialorder %v808, 1e-08
  %vm825 = vcmp.gt.f32.partialorder %v809, 1e-08
  %vm826 = vcmp.gt.f32.partialorder %v810, 1e-08
  %vm827 = vcmp.gt.f32.partialorder %v811, 1e-08
  %vm828 = vcmp.gt.f32.partialorder %v812, 1e-08
  %vm829 = vcmp.gt.f32.partialorder %v813, 1e-08
  %vm830 = vcmp.gt.f32.partialorder %v814, 1e-08
  %vm831 = vcmp.gt.f32.partialorder %v815, 1e-08
  %vm832 = vcmp.gt.f32.partialorder %v816, 1e-08
  %vm833 = vcmp.gt.f32.partialorder %v817, 1e-08
  %vm834 = vcmp.gt.f32.partialorder %v818, 1e-08
  %vm835 = vcmp.gt.f32.partialorder %v819, 1e-08
  %vm836 = vcmp.gt.f32.partialorder %v820, 1e-08
  %vm837 = vcmp.gt.f32.partialorder %v821, 1e-08
  %vm838 = vcmp.gt.f32.partialorder %v822, 1e-08
  %vm839 = vcmp.ge.f32.partialorder %v788, 0.0
  %vm840 = vcmp.ge.f32.partialorder %v789, 0.0
  %vm841 = vcmp.ge.f32.partialorder %v790, 0.0
  %vm842 = vcmp.ge.f32.partialorder %v791, 0.0
  %vm843 = vcmp.ge.f32.partialorder %v792, 0.0
  %vm844 = vcmp.ge.f32.partialorder %v793, 0.0
  %vm845 = vcmp.ge.f32.partialorder %v794, 0.0
  %vm846 = vcmp.ge.f32.partialorder %v795, 0.0
  %vm847 = vcmp.ge.f32.partialorder %v796, 0.0
  %vm848 = vcmp.ge.f32.partialorder %v797, 0.0
  %vm849 = vcmp.ge.f32.partialorder %v798, 0.0
  %vm850 = vcmp.ge.f32.partialorder %v799, 0.0
  %vm851 = vcmp.ge.f32.partialorder %v800, 0.0
  %vm852 = vcmp.ge.f32.partialorder %v801, 0.0
  %vm853 = vcmp.ge.f32.partialorder %v802, 0.0
  %vm854 = vcmp.ge.f32.partialorder %v803, 0.0
  %v856 = vlaneseq
  %v857 = vshrl.u32 %v856, 7
  %v858 = vsub.s32 0, %v857
  %v859 = vrot.slane %v805, %v858
  %v862 = vlaneseq
  %v863 = vshrl.u32 %v862, 7
  %v864 = vsub.s32 0, %v863
  %v865 = vrot.slane %v806, %v864
  %v867 = vsel %vm839, %v859, %v865
  %v868 = vsel %vm840, %v859, %v865
  %v869 = vsel %vm841, %v859, %v865
  %v870 = vsel %vm842, %v859, %v865
  %v871 = vsel %vm843, %v859, %v865
  %v872 = vsel %vm844, %v859, %v865
  %v873 = vsel %vm845, %v859, %v865
  %v874 = vsel %vm846, %v859, %v865
  %v875 = vsel %vm847, %v859, %v865
  %v876 = vsel %vm848, %v859, %v865
  %v877 = vsel %vm849, %v859, %v865
  %v878 = vsel %vm850, %v859, %v865
  %v879 = vsel %vm851, %v859, %v865
  %v880 = vsel %vm852, %v859, %v865
  %v881 = vsel %vm853, %v859, %v865
  %v882 = vsel %vm854, %v859, %v865
  %v883 = vsel %vm823, %v788, 1e-08
  %v884 = vsel %vm824, %v789, 1e-08
  %v885 = vsel %vm825, %v790, 1e-08
  %v886 = vsel %vm826, %v791, 1e-08
  %v887 = vsel %vm827, %v792, 1e-08
  %v888 = vsel %vm828, %v793, 1e-08
  %v889 = vsel %vm829, %v794, 1e-08
  %v890 = vsel %vm830, %v795, 1e-08
  %v891 = vsel %vm831, %v796, 1e-08
  %v892 = vsel %vm832, %v797, 1e-08
  %v893 = vsel %vm833, %v798, 1e-08
  %v894 = vsel %vm834, %v799, 1e-08
  %v895 = vsel %vm835, %v800, 1e-08
  %v896 = vsel %vm836, %v801, 1e-08
  %v897 = vsel %vm837, %v802, 1e-08
  %v898 = vsel %vm838, %v803, 1e-08
  %v899 = vrcp.pop %v883
  %v900 = vmul.f32 %v867, %v899
  %v901 = vrcp.pop %v884
  %v902 = vmul.f32 %v868, %v901
  %v903 = vrcp.pop %v885
  %v904 = vmul.f32 %v869, %v903
  %v905 = vrcp.pop %v886
  %v906 = vmul.f32 %v870, %v905
  %v907 = vrcp.pop %v887
  %v908 = vmul.f32 %v871, %v907
  %v909 = vrcp.pop %v888
  %v910 = vmul.f32 %v872, %v909
  %v911 = vrcp.pop %v889
  %v912 = vmul.f32 %v873, %v911
  %v913 = vrcp.pop %v890
  %v914 = vmul.f32 %v874, %v913
  %v915 = vrcp.pop %v891
  %v916 = vmul.f32 %v875, %v915
  %v917 = vrcp.pop %v892
  %v918 = vmul.f32 %v876, %v917
  %v919 = vrcp.pop %v893
  %v920 = vmul.f32 %v877, %v919
  %v921 = vrcp.pop %v894
  %v922 = vmul.f32 %v878, %v921
  %v923 = vrcp.pop %v895
  %v924 = vmul.f32 %v879, %v923
  %v925 = vrcp.pop %v896
  %v926 = vmul.f32 %v880, %v925
  %v927 = vrcp.pop %v897
  %v928 = vmul.f32 %v881, %v927
  %v929 = vrcp.pop %v898
  %v930 = vmul.f32 %v882, %v929
  %v931 = vsel %vm823, %v900, 4.0
  %v932 = vsel %vm824, %v902, 4.0
  %v933 = vsel %vm825, %v904, 4.0
  %v934 = vsel %vm826, %v906, 4.0
  %v935 = vsel %vm827, %v908, 4.0
  %v936 = vsel %vm828, %v910, 4.0
  %v937 = vsel %vm829, %v912, 4.0
  %v938 = vsel %vm830, %v914, 4.0
  %v939 = vsel %vm831, %v916, 4.0
  %v940 = vsel %vm832, %v918, 4.0
  %v941 = vsel %vm833, %v920, 4.0
  %v942 = vsel %vm834, %v922, 4.0
  %v943 = vsel %vm835, %v924, 4.0
  %v944 = vsel %vm836, %v926, 4.0
  %v945 = vsel %vm837, %v928, 4.0
  %v946 = vsel %vm838, %v930, 4.0
  %v947 = vsel %vm707, %v931, inf
  %948 = vmin.xlane.f32.xlu0 %v947
  %v949 = vpop.xlane.xlu0 %948
  %v950 = vsel %vm707, %v932, inf
  %951 = vmin.xlane.f32.xlu0 %v950
  %v952 = vpop.xlane.xlu0 %951
  %v953 = vsel %vm707, %v933, inf
  %954 = vmin.xlane.f32.xlu0 %v953
  %v955 = vpop.xlane.xlu0 %954
  %v956 = vsel %vm707, %v934, inf
  %957 = vmin.xlane.f32.xlu0 %v956
  %v958 = vpop.xlane.xlu0 %957
  %v959 = vsel %vm707, %v935, inf
  %960 = vmin.xlane.f32.xlu0 %v959
  %v961 = vpop.xlane.xlu0 %960
  %v962 = vsel %vm707, %v936, inf
  %963 = vmin.xlane.f32.xlu0 %v962
  %v964 = vpop.xlane.xlu0 %963
  %v965 = vsel %vm707, %v937, inf
  %966 = vmin.xlane.f32.xlu0 %v965
  %v967 = vpop.xlane.xlu0 %966
  %v968 = vsel %vm707, %v938, inf
  %969 = vmin.xlane.f32.xlu0 %v968
  %v970 = vpop.xlane.xlu0 %969
  %v971 = vsel %vm707, %v939, inf
  %972 = vmin.xlane.f32.xlu0 %v971
  %v973 = vpop.xlane.xlu0 %972
  %v974 = vsel %vm707, %v940, inf
  %975 = vmin.xlane.f32.xlu0 %v974
  %v976 = vpop.xlane.xlu0 %975
  %v977 = vsel %vm707, %v941, inf
  %978 = vmin.xlane.f32.xlu0 %v977
  %v979 = vpop.xlane.xlu0 %978
  %v980 = vsel %vm707, %v942, inf
  %981 = vmin.xlane.f32.xlu0 %v980
  %v982 = vpop.xlane.xlu0 %981
  %v983 = vsel %vm707, %v943, inf
  %984 = vmin.xlane.f32.xlu0 %v983
  %v985 = vpop.xlane.xlu0 %984
  %v986 = vsel %vm707, %v944, inf
  %987 = vmin.xlane.f32.xlu0 %v986
  %v988 = vpop.xlane.xlu0 %987
  %v989 = vsel %vm707, %v945, inf
  %990 = vmin.xlane.f32.xlu0 %v989
  %v991 = vpop.xlane.xlu0 %990
  %v992 = vsel %vm707, %v946, inf
  %993 = vmin.xlane.f32.xlu0 %v992
  %v994 = vpop.xlane.xlu0 %993
  %v995 = vmin.f32 %v949, 4.0
  %v996 = vmin.f32 %v952, 4.0
  %v997 = vmin.f32 %v955, 4.0
  %v998 = vmin.f32 %v958, 4.0
  %v999 = vmin.f32 %v961, 4.0
  %v1000 = vmin.f32 %v964, 4.0
  %v1001 = vmin.f32 %v967, 4.0
  %v1002 = vmin.f32 %v970, 4.0
  %v1003 = vmin.f32 %v973, 4.0
  %v1004 = vmin.f32 %v976, 4.0
  %v1005 = vmin.f32 %v979, 4.0
  %v1006 = vmin.f32 %v982, 4.0
  %v1007 = vmin.f32 %v985, 4.0
  %v1008 = vmin.f32 %v988, 4.0
  %v1009 = vmin.f32 %v991, 4.0
  %v1010 = vmin.f32 %v994, 4.0
  %v1011 = vxor.u32 %v613, 2147483648
  %v1012 = vxor.u32 %v618, 2147483648
  %v1013 = vxor.u32 %v623, 2147483648
  %v1014 = vxor.u32 %v628, 2147483648
  %v1015 = vxor.u32 %v633, 2147483648
  %v1016 = vxor.u32 %v638, 2147483648
  %v1017 = vxor.u32 %v643, 2147483648
  %v1018 = vxor.u32 %v648, 2147483648
  %v1019 = vxor.u32 %v653, 2147483648
  %v1020 = vxor.u32 %v658, 2147483648
  %v1021 = vxor.u32 %v663, 2147483648
  %v1022 = vxor.u32 %v668, 2147483648
  %v1023 = vxor.u32 %v673, 2147483648
  %v1024 = vxor.u32 %v678, 2147483648
  %v1025 = vxor.u32 %v683, 2147483648
  %v1026 = vxor.u32 %v688, 2147483648
  %v1027 = vmul.f32 %v1011, 1.442695
  %v1028 = vpow.pop %v1027
  %v1029 = vmul.f32 %v1012, 1.442695
  %v1030 = vpow.pop %v1029
  %v1031 = vmul.f32 %v1013, 1.442695
  %v1032 = vpow.pop %v1031
  %v1033 = vmul.f32 %v1014, 1.442695
  %v1034 = vpow.pop %v1033
  %v1035 = vmul.f32 %v1015, 1.442695
  %v1036 = vpow.pop %v1035
  %v1037 = vmul.f32 %v1016, 1.442695
  %v1038 = vpow.pop %v1037
  %v1039 = vmul.f32 %v1017, 1.442695
  %v1040 = vpow.pop %v1039
  %v1041 = vmul.f32 %v1018, 1.442695
  %v1042 = vpow.pop %v1041
  %v1043 = vmul.f32 %v1019, 1.442695
  %v1044 = vpow.pop %v1043
  %v1045 = vmul.f32 %v1020, 1.442695
  %v1046 = vpow.pop %v1045
  %v1047 = vmul.f32 %v1021, 1.442695
  %v1048 = vpow.pop %v1047
  %v1049 = vmul.f32 %v1022, 1.442695
  %v1050 = vpow.pop %v1049
  %v1051 = vmul.f32 %v1023, 1.442695
  %v1052 = vpow.pop %v1051
  %v1053 = vmul.f32 %v1024, 1.442695
  %v1054 = vpow.pop %v1053
  %v1055 = vmul.f32 %v1025, 1.442695
  %v1056 = vpow.pop %v1055
  %v1057 = vmul.f32 %v1026, 1.442695
  %v1058 = vpow.pop %v1057
  %v1059 = vadd.f32 %v1028, 1.0
  %v1060 = vadd.f32 %v1030, 1.0
  %v1061 = vadd.f32 %v1032, 1.0
  %v1062 = vadd.f32 %v1034, 1.0
  %v1063 = vadd.f32 %v1036, 1.0
  %v1064 = vadd.f32 %v1038, 1.0
  %v1065 = vadd.f32 %v1040, 1.0
  %v1066 = vadd.f32 %v1042, 1.0
  %v1067 = vadd.f32 %v1044, 1.0
  %v1068 = vadd.f32 %v1046, 1.0
  %v1069 = vadd.f32 %v1048, 1.0
  %v1070 = vadd.f32 %v1050, 1.0
  %v1071 = vadd.f32 %v1052, 1.0
  %v1072 = vadd.f32 %v1054, 1.0
  %v1073 = vadd.f32 %v1056, 1.0
  %v1074 = vadd.f32 %v1058, 1.0
  %v1075 = vrcp.pop %v1059
  %v1076 = vmul.f32 1.0, %v1075
  %v1077 = vrcp.pop %v1060
  %v1078 = vmul.f32 1.0, %v1077
  %v1079 = vrcp.pop %v1061
  %v1080 = vmul.f32 1.0, %v1079
  %v1081 = vrcp.pop %v1062
  %v1082 = vmul.f32 1.0, %v1081
  %v1083 = vrcp.pop %v1063
  %v1084 = vmul.f32 1.0, %v1083
  %v1085 = vrcp.pop %v1064
  %v1086 = vmul.f32 1.0, %v1085
  %v1087 = vrcp.pop %v1065
  %v1088 = vmul.f32 1.0, %v1087
  %v1089 = vrcp.pop %v1066
  %v1090 = vmul.f32 1.0, %v1089
  %v1091 = vrcp.pop %v1067
  %v1092 = vmul.f32 1.0, %v1091
  %v1093 = vrcp.pop %v1068
  %v1094 = vmul.f32 1.0, %v1093
  %v1095 = vrcp.pop %v1069
  %v1096 = vmul.f32 1.0, %v1095
  %v1097 = vrcp.pop %v1070
  %v1098 = vmul.f32 1.0, %v1097
  %v1099 = vrcp.pop %v1071
  %v1100 = vmul.f32 1.0, %v1099
  %v1101 = vrcp.pop %v1072
  %v1102 = vmul.f32 1.0, %v1101
  %v1103 = vrcp.pop %v1073
  %v1104 = vmul.f32 1.0, %v1103
  %v1105 = vrcp.pop %v1074
  %v1106 = vmul.f32 1.0, %v1105
  %v1107 = vmul.f32 %v1076, %v995
  %v1108 = vmul.f32 %v1078, %v996
  %v1109 = vmul.f32 %v1080, %v997
  %v1110 = vmul.f32 %v1082, %v998
  %v1111 = vmul.f32 %v1084, %v999
  %v1112 = vmul.f32 %v1086, %v1000
  %v1113 = vmul.f32 %v1088, %v1001
  %v1114 = vmul.f32 %v1090, %v1002
  %v1115 = vmul.f32 %v1092, %v1003
  %v1116 = vmul.f32 %v1094, %v1004
  %v1117 = vmul.f32 %v1096, %v1005
  %v1118 = vmul.f32 %v1098, %v1006
  %v1119 = vmul.f32 %v1100, %v1007
  %v1120 = vmul.f32 %v1102, %v1008
  %v1121 = vmul.f32 %v1104, %v1009
  %v1122 = vmul.f32 %v1106, %v1010
  %1124 = vset.pattern.permute.xlu0 8
  %1125 = vperm.xlu0 %1124, %v1107
  %v1126 = vpop.permute.xlu0 %1125
  %1129 = vset.pattern.permute.xlu0 8
  %1130 = vperm.xlu0 %1129, %v1108
  %v1131 = vpop.permute.xlu0 %1130
  %1134 = vset.pattern.permute.xlu0 8
  %1135 = vperm.xlu0 %1134, %v1109
  %v1136 = vpop.permute.xlu0 %1135
  %1139 = vset.pattern.permute.xlu0 8
  %1140 = vperm.xlu0 %1139, %v1110
  %v1141 = vpop.permute.xlu0 %1140
  %1144 = vset.pattern.permute.xlu0 8
  %1145 = vperm.xlu0 %1144, %v1111
  %v1146 = vpop.permute.xlu0 %1145
  %1149 = vset.pattern.permute.xlu0 8
  %1150 = vperm.xlu0 %1149, %v1112
  %v1151 = vpop.permute.xlu0 %1150
  %1154 = vset.pattern.permute.xlu0 8
  %1155 = vperm.xlu0 %1154, %v1113
  %v1156 = vpop.permute.xlu0 %1155
  %1159 = vset.pattern.permute.xlu0 8
  %1160 = vperm.xlu0 %1159, %v1114
  %v1161 = vpop.permute.xlu0 %1160
  %1164 = vset.pattern.permute.xlu0 8
  %1165 = vperm.xlu0 %1164, %v1115
  %v1166 = vpop.permute.xlu0 %1165
  %1169 = vset.pattern.permute.xlu0 8
  %1170 = vperm.xlu0 %1169, %v1116
  %v1171 = vpop.permute.xlu0 %1170
  %1174 = vset.pattern.permute.xlu0 8
  %1175 = vperm.xlu0 %1174, %v1117
  %v1176 = vpop.permute.xlu0 %1175
  %1179 = vset.pattern.permute.xlu0 8
  %1180 = vperm.xlu0 %1179, %v1118
  %v1181 = vpop.permute.xlu0 %1180
  %1184 = vset.pattern.permute.xlu0 8
  %1185 = vperm.xlu0 %1184, %v1119
  %v1186 = vpop.permute.xlu0 %1185
  %1189 = vset.pattern.permute.xlu0 8
  %1190 = vperm.xlu0 %1189, %v1120
  %v1191 = vpop.permute.xlu0 %1190
  %1194 = vset.pattern.permute.xlu0 8
  %1195 = vperm.xlu0 %1194, %v1121
  %v1196 = vpop.permute.xlu0 %1195
  %1199 = vset.pattern.permute.xlu0 8
  %1200 = vperm.xlu0 %1199, %v1122
  %v1201 = vpop.permute.xlu0 %1200
  %v1203 = vmul.f32 %v1126, %v788
  %v1204 = vmul.f32 %v1131, %v789
  %v1205 = vmul.f32 %v1136, %v790
  %v1206 = vmul.f32 %v1141, %v791
  %v1207 = vmul.f32 %v1146, %v792
  %v1208 = vmul.f32 %v1151, %v793
  %v1209 = vmul.f32 %v1156, %v794
  %v1210 = vmul.f32 %v1161, %v795
  %v1211 = vmul.f32 %v1166, %v796
  %v1212 = vmul.f32 %v1171, %v797
  %v1213 = vmul.f32 %v1176, %v798
  %v1214 = vmul.f32 %v1181, %v799
  %v1215 = vmul.f32 %v1186, %v800
  %v1216 = vmul.f32 %v1191, %v801
  %v1217 = vmul.f32 %v1196, %v802
  %v1218 = vmul.f32 %v1201, %v803
  %v1220 = vlaneseq
  %v1221 = vshrl.u32 %v1220, 7
  %v1222 = vsub.s32 0, %v1221
  %v1223 = vrot.slane %v804, %v1222
  %v1225 = vadd.f32 %v1223, %v1203
  %v1226 = vadd.f32 %v1223, %v1204
  %v1227 = vadd.f32 %v1223, %v1205
  %v1228 = vadd.f32 %v1223, %v1206
  %v1229 = vadd.f32 %v1223, %v1207
  %v1230 = vadd.f32 %v1223, %v1208
  %v1231 = vadd.f32 %v1223, %v1209
  %v1232 = vadd.f32 %v1223, %v1210
  %v1233 = vadd.f32 %v1223, %v1211
  %v1234 = vadd.f32 %v1223, %v1212
  %v1235 = vadd.f32 %v1223, %v1213
  %v1236 = vadd.f32 %v1223, %v1214
  %v1237 = vadd.f32 %v1223, %v1215
  %v1238 = vadd.f32 %v1223, %v1216
  %v1239 = vadd.f32 %v1223, %v1217
  %v1240 = vadd.f32 %v1223, %v1218
  %v1241 = vld [vmem:[%s10] sm:$0xff]
  %v1242 = vld [vmem:[%s11] sm:$0x1]
  %v1244 = vlaneseq
  %v1245 = vshrl.u32 %v1244, 7
  %v1246 = vsub.s32 0, %v1245
  %v1247 = vrot.slane %v1242, %v1246
  %v1250 = vsel %vm707, %v1225, 0
  %v1253 = vsel %vm707, %v1226, 0
  %v1256 = vsel %vm707, %v1227, 0
  %v1259 = vsel %vm707, %v1228, 0
  %v1262 = vsel %vm707, %v1229, 0
  %v1265 = vsel %vm707, %v1230, 0
  %v1268 = vsel %vm707, %v1231, 0
  %v1271 = vsel %vm707, %v1232, 0
  %v1274 = vsel %vm707, %v1233, 0
  %v1277 = vsel %vm707, %v1234, 0
  %v1280 = vsel %vm707, %v1235, 0
  %v1283 = vsel %vm707, %v1236, 0
  %v1286 = vsel %vm707, %v1237, 0
  %v1289 = vsel %vm707, %v1238, 0
  %v1292 = vsel %vm707, %v1239, 0
  %v1295 = vsel %vm707, %v1240, 0
  %1297 = vmatprep.subr.mxu0 0.0
  %1298 = vmatpush1.msra.mxu0 %v1241
  %1299 = vmatprep.subr.mxu0 0.0
  %1300 = vmatpush1.msra.mxu0 0.0
  %1301 = vmatprep.subr.mxu0 0.0
  %1302 = vmatpush1.msra.mxu0 0.0
  %1303 = vmatprep.subr.mxu0 0.0
  %1304 = vmatpush1.msra.mxu0 0.0
  %1305 = vmatprep.subr.mxu0 0.0
  %1306 = vmatpush1.msra.mxu0 0.0
  %1307 = vmatprep.subr.mxu0 0.0
  %1308 = vmatpush1.msra.mxu0 0.0
  %1309 = vmatprep.subr.mxu0 0.0
  %1310 = vmatpush1.msra.mxu0 0.0
  %1311 = vmatprep.subr.mxu0 0.0
  %1312 = vmatpush1.msra.mxu0 0.0
  %1313 = vmatprep.subr.mxu0 0.0
  %1314 = vmatpush1.msra.mxu0 0.0
  %1315 = vmatprep.subr.mxu0 0.0
  %1316 = vmatpush1.msra.mxu0 0.0
  %1317 = vmatprep.subr.mxu0 0.0
  %1318 = vmatpush1.msra.mxu0 0.0
  %1319 = vmatprep.subr.mxu0 0.0
  %1320 = vmatpush1.msra.mxu0 0.0
  %1321 = vmatprep.subr.mxu0 0.0
  %1322 = vmatpush1.msra.mxu0 0.0
  %1323 = vmatprep.subr.mxu0 0.0
  %1324 = vmatpush1.msra.mxu0 0.0
  %1325 = vmatprep.subr.mxu0 0.0
  %1326 = vmatpush1.msra.mxu0 0.0
  %1327 = vmatprep.subr.mxu0 0.0
  %1328 = vmatpush1.msra.mxu0 0.0
  %1329 = vmatprep.subr.mxu0 0.0
  %1330 = vmatpush1.msra.mxu0 0.0
  %1331 = vmatprep.subr.mxu0 0.0
  %1332 = vmatpush1.msra.mxu0 0.0
  %1333 = vmatprep.subr.mxu0 0.0
  %1334 = vmatpush1.msra.mxu0 0.0
  %1335 = vmatprep.subr.mxu0 0.0
  %1336 = vmatpush1.msra.mxu0 0.0
  %1337 = vmatprep.subr.mxu0 0.0
  %1338 = vmatpush1.msra.mxu0 0.0
  %1339 = vmatprep.subr.mxu0 0.0
  %1340 = vmatpush1.msra.mxu0 0.0
  %1341 = vmatprep.subr.mxu0 0.0
  %1342 = vmatpush1.msra.mxu0 0.0
  %1343 = vmatprep.subr.mxu0 0.0
  %1344 = vmatpush1.msra.mxu0 0.0
  %1345 = vmatprep.subr.mxu0 0.0
  %1346 = vmatpush1.msra.mxu0 0.0
  %1347 = vmatprep.subr.mxu0 0.0
  %1348 = vmatpush1.msra.mxu0 0.0
  %1349 = vmatprep.subr.mxu0 0.0
  %1350 = vmatpush1.msra.mxu0 0.0
  %1351 = vmatprep.subr.mxu0 0.0
  %1352 = vmatpush1.msra.mxu0 0.0
  %1353 = vmatprep.subr.mxu0 0.0
  %1354 = vmatpush1.msra.mxu0 0.0
  %1355 = vmatprep.subr.mxu0 0.0
  %1356 = vmatpush1.msra.mxu0 0.0
  %1357 = vmatprep.subr.mxu0 0.0
  %1358 = vmatpush1.msra.mxu0 0.0
  %1359 = vmatprep.subr.mxu0 0.0
  %1360 = vmatpush1.msra.mxu0 0.0
  %1361 = vmatprep.mubr.f32.mxu0 0.0
  %1362 = vmatmul.mubr.f32.gmra.mrb[0].mxu0 %v1250
  %v1363 = vpop.f32.mrb[0].mxu0
  %v1364 = vadd.f32 %v1247, %v1363
  %v1365 = vpop.f32.mrb[0].mxu0
  %1366 = vmatprep.mubr.f32.mxu0 0.0
  %1367 = vmatmul.mubr.f32.gmra.mrb[0].mxu0 %v1253
  %v1368 = vpop.f32.mrb[0].mxu0
  %v1369 = vadd.f32 %v1247, %v1368
  %v1370 = vpop.f32.mrb[0].mxu0
  %1371 = vmatprep.mubr.f32.mxu0 0.0
  %1372 = vmatmul.mubr.f32.gmra.mrb[0].mxu0 %v1256
  %v1373 = vpop.f32.mrb[0].mxu0
  %v1374 = vadd.f32 %v1247, %v1373
  %v1375 = vpop.f32.mrb[0].mxu0
  %1376 = vmatprep.mubr.f32.mxu0 0.0
  %1377 = vmatmul.mubr.f32.gmra.mrb[0].mxu0 %v1259
  %v1378 = vpop.f32.mrb[0].mxu0
  %v1379 = vadd.f32 %v1247, %v1378
  %v1380 = vpop.f32.mrb[0].mxu0
  %1381 = vmatprep.mubr.f32.mxu0 0.0
  %1382 = vmatmul.mubr.f32.gmra.mrb[0].mxu0 %v1262
  %v1383 = vpop.f32.mrb[0].mxu0
  %v1384 = vadd.f32 %v1247, %v1383
  %v1385 = vpop.f32.mrb[0].mxu0
  %1386 = vmatprep.mubr.f32.mxu0 0.0
  %1387 = vmatmul.mubr.f32.gmra.mrb[0].mxu0 %v1265
  %v1388 = vpop.f32.mrb[0].mxu0
  %v1389 = vadd.f32 %v1247, %v1388
  %v1390 = vpop.f32.mrb[0].mxu0
  %1391 = vmatprep.mubr.f32.mxu0 0.0
  %1392 = vmatmul.mubr.f32.gmra.mrb[0].mxu0 %v1268
  %v1393 = vpop.f32.mrb[0].mxu0
  %v1394 = vadd.f32 %v1247, %v1393
  %v1395 = vpop.f32.mrb[0].mxu0
  %1396 = vmatprep.mubr.f32.mxu0 0.0
  %1397 = vmatmul.mubr.f32.gmra.mrb[0].mxu0 %v1271
  %v1398 = vpop.f32.mrb[0].mxu0
  %v1399 = vadd.f32 %v1247, %v1398
  %v1400 = vpop.f32.mrb[0].mxu0
  %1401 = vmatprep.mubr.f32.mxu0 0.0
  %1402 = vmatmul.mubr.f32.gmra.mrb[0].mxu0 %v1274
  %v1403 = vpop.f32.mrb[0].mxu0
  %v1404 = vadd.f32 %v1247, %v1403
  %v1405 = vpop.f32.mrb[0].mxu0
  %1406 = vmatprep.mubr.f32.mxu0 0.0
  %1407 = vmatmul.mubr.f32.gmra.mrb[0].mxu0 %v1277
  %v1408 = vpop.f32.mrb[0].mxu0
  %v1409 = vadd.f32 %v1247, %v1408
  %v1410 = vpop.f32.mrb[0].mxu0
  %1411 = vmatprep.mubr.f32.mxu0 0.0
  %1412 = vmatmul.mubr.f32.gmra.mrb[0].mxu0 %v1280
  %v1413 = vpop.f32.mrb[0].mxu0
  %v1414 = vadd.f32 %v1247, %v1413
  %v1415 = vpop.f32.mrb[0].mxu0
  %1416 = vmatprep.mubr.f32.mxu0 0.0
  %1417 = vmatmul.mubr.f32.gmra.mrb[0].mxu0 %v1283
  %v1418 = vpop.f32.mrb[0].mxu0
  %v1419 = vadd.f32 %v1247, %v1418
  %v1420 = vpop.f32.mrb[0].mxu0
  %1421 = vmatprep.mubr.f32.mxu0 0.0
  %1422 = vmatmul.mubr.f32.gmra.mrb[0].mxu0 %v1286
  %v1423 = vpop.f32.mrb[0].mxu0
  %v1424 = vadd.f32 %v1247, %v1423
  %v1425 = vpop.f32.mrb[0].mxu0
  %1426 = vmatprep.mubr.f32.mxu0 0.0
  %1427 = vmatmul.mubr.f32.gmra.mrb[0].mxu0 %v1289
  %v1428 = vpop.f32.mrb[0].mxu0
  %v1429 = vadd.f32 %v1247, %v1428
  %v1430 = vpop.f32.mrb[0].mxu0
  %1431 = vmatprep.mubr.f32.mxu0 0.0
  %1432 = vmatmul.mubr.f32.gmra.mrb[0].mxu0 %v1292
  %v1433 = vpop.f32.mrb[0].mxu0
  %v1434 = vadd.f32 %v1247, %v1433
  %v1435 = vpop.f32.mrb[0].mxu0
  %1436 = vmatprep.mubr.f32.mxu0 0.0
  %1437 = vmatmul.mubr.f32.gmra.mrb[0].mxu0 %v1295
  %v1438 = vpop.f32.mrb[0].mxu0
  %v1439 = vadd.f32 %v1247, %v1438
  %v1440 = vpop.f32.mrb[0].mxu0
  %1441 = vdwg.mxu0
  %v1442 = vmax.f32 %v1364, 0.0
  %v1443 = vmax.f32 %v1369, 0.0
  %v1444 = vmax.f32 %v1374, 0.0
  %v1445 = vmax.f32 %v1379, 0.0
  %v1446 = vmax.f32 %v1384, 0.0
  %v1447 = vmax.f32 %v1389, 0.0
  %v1448 = vmax.f32 %v1394, 0.0
  %v1449 = vmax.f32 %v1399, 0.0
  %v1450 = vmax.f32 %v1404, 0.0
  %v1451 = vmax.f32 %v1409, 0.0
  %v1452 = vmax.f32 %v1414, 0.0
  %v1453 = vmax.f32 %v1419, 0.0
  %v1454 = vmax.f32 %v1424, 0.0
  %v1455 = vmax.f32 %v1429, 0.0
  %v1456 = vmax.f32 %v1434, 0.0
  %v1457 = vmax.f32 %v1439, 0.0
  %v1458 = vld [vmem:[%s12] sm:$0xff]
  %v1459 = vld [vmem:[%s12 + $0x8] sm:$0xff]
  %v1460 = vld [vmem:[%s12 + $0x10] sm:$0xff]
  %v1461 = vld [vmem:[%s12 + $0x18] sm:$0xff]
  %v1462 = vld [vmem:[%s13] sm:$0x1]
  %v1464 = vlaneseq
  %v1465 = vshrl.u32 %v1464, 7
  %v1466 = vsub.s32 0, %v1465
  %v1467 = vrot.slane %v1462, %v1466
  %v1470 = vsel %vm293, %v1442, 0
  %v1473 = vsel %vm293, %v1443, 0
  %v1476 = vsel %vm293, %v1444, 0
  %v1479 = vsel %vm293, %v1445, 0
  %v1482 = vsel %vm293, %v1446, 0
  %v1485 = vsel %vm293, %v1447, 0
  %v1488 = vsel %vm293, %v1448, 0
  %v1491 = vsel %vm293, %v1449, 0
  %v1494 = vsel %vm293, %v1450, 0
  %v1497 = vsel %vm293, %v1451, 0
  %v1500 = vsel %vm293, %v1452, 0
  %v1503 = vsel %vm293, %v1453, 0
  %v1506 = vsel %vm293, %v1454, 0
  %v1509 = vsel %vm293, %v1455, 0
  %v1512 = vsel %vm293, %v1456, 0
  %v1515 = vsel %vm293, %v1457, 0
  %1517 = vmatprep.subr.mxu0 0.0
  %1518 = vmatpush1.msra.mxu0 %v1458
  %1519 = vmatprep.subr.mxu0 0.0
  %1520 = vmatpush1.msra.mxu0 %v1459
  %1521 = vmatprep.subr.mxu0 0.0
  %1522 = vmatpush1.msra.mxu0 %v1460
  %1523 = vmatprep.subr.mxu0 0.0
  %1524 = vmatpush1.msra.mxu0 %v1461
  %1525 = vmatprep.subr.mxu0 0.0
  %1526 = vmatpush1.msra.mxu0 0.0
  %1527 = vmatprep.subr.mxu0 0.0
  %1528 = vmatpush1.msra.mxu0 0.0
  %1529 = vmatprep.subr.mxu0 0.0
  %1530 = vmatpush1.msra.mxu0 0.0
  %1531 = vmatprep.subr.mxu0 0.0
  %1532 = vmatpush1.msra.mxu0 0.0
  %1533 = vmatprep.subr.mxu0 0.0
  %1534 = vmatpush1.msra.mxu0 0.0
  %1535 = vmatprep.subr.mxu0 0.0
  %1536 = vmatpush1.msra.mxu0 0.0
  %1537 = vmatprep.subr.mxu0 0.0
  %1538 = vmatpush1.msra.mxu0 0.0
  %1539 = vmatprep.subr.mxu0 0.0
  %1540 = vmatpush1.msra.mxu0 0.0
  %1541 = vmatprep.subr.mxu0 0.0
  %1542 = vmatpush1.msra.mxu0 0.0
  %1543 = vmatprep.subr.mxu0 0.0
  %1544 = vmatpush1.msra.mxu0 0.0
  %1545 = vmatprep.subr.mxu0 0.0
  %1546 = vmatpush1.msra.mxu0 0.0
  %1547 = vmatprep.subr.mxu0 0.0
  %1548 = vmatpush1.msra.mxu0 0.0
  %1549 = vmatprep.subr.mxu0 0.0
  %1550 = vmatpush1.msra.mxu0 0.0
  %1551 = vmatprep.subr.mxu0 0.0
  %1552 = vmatpush1.msra.mxu0 0.0
  %1553 = vmatprep.subr.mxu0 0.0
  %1554 = vmatpush1.msra.mxu0 0.0
  %1555 = vmatprep.subr.mxu0 0.0
  %1556 = vmatpush1.msra.mxu0 0.0
  %1557 = vmatprep.subr.mxu0 0.0
  %1558 = vmatpush1.msra.mxu0 0.0
  %1559 = vmatprep.subr.mxu0 0.0
  %1560 = vmatpush1.msra.mxu0 0.0
  %1561 = vmatprep.subr.mxu0 0.0
  %1562 = vmatpush1.msra.mxu0 0.0
  %1563 = vmatprep.subr.mxu0 0.0
  %1564 = vmatpush1.msra.mxu0 0.0
  %1565 = vmatprep.subr.mxu0 0.0
  %1566 = vmatpush1.msra.mxu0 0.0
  %1567 = vmatprep.subr.mxu0 0.0
  %1568 = vmatpush1.msra.mxu0 0.0
  %1569 = vmatprep.subr.mxu0 0.0
  %1570 = vmatpush1.msra.mxu0 0.0
  %1571 = vmatprep.subr.mxu0 0.0
  %1572 = vmatpush1.msra.mxu0 0.0
  %1573 = vmatprep.subr.mxu0 0.0
  %1574 = vmatpush1.msra.mxu0 0.0
  %1575 = vmatprep.subr.mxu0 0.0
  %1576 = vmatpush1.msra.mxu0 0.0
  %1577 = vmatprep.subr.mxu0 0.0
  %1578 = vmatpush1.msra.mxu0 0.0
  %1579 = vmatprep.subr.mxu0 0.0
  %1580 = vmatpush1.msra.mxu0 0.0
  %1581 = vmatprep.mubr.f32.mxu0 0.0
  %1582 = vmatmul.mubr.f32.gmra.mrb[0].mxu0 %v1470
  %v1583 = vpop.f32.mrb[0].mxu0
  %v1584 = vadd.f32 %v1467, %v1583
  %v1585 = vpop.f32.mrb[0].mxu0
  %1586 = vmatprep.mubr.f32.mxu0 0.0
  %1587 = vmatmul.mubr.f32.gmra.mrb[0].mxu0 %v1473
  %v1588 = vpop.f32.mrb[0].mxu0
  %v1589 = vadd.f32 %v1467, %v1588
  %v1590 = vpop.f32.mrb[0].mxu0
  %1591 = vmatprep.mubr.f32.mxu0 0.0
  %1592 = vmatmul.mubr.f32.gmra.mrb[0].mxu0 %v1476
  %v1593 = vpop.f32.mrb[0].mxu0
  %v1594 = vadd.f32 %v1467, %v1593
  %v1595 = vpop.f32.mrb[0].mxu0
  %1596 = vmatprep.mubr.f32.mxu0 0.0
  %1597 = vmatmul.mubr.f32.gmra.mrb[0].mxu0 %v1479
  %v1598 = vpop.f32.mrb[0].mxu0
  %v1599 = vadd.f32 %v1467, %v1598
  %v1600 = vpop.f32.mrb[0].mxu0
  %1601 = vmatprep.mubr.f32.mxu0 0.0
  %1602 = vmatmul.mubr.f32.gmra.mrb[0].mxu0 %v1482
  %v1603 = vpop.f32.mrb[0].mxu0
  %v1604 = vadd.f32 %v1467, %v1603
  %v1605 = vpop.f32.mrb[0].mxu0
  %1606 = vmatprep.mubr.f32.mxu0 0.0
  %1607 = vmatmul.mubr.f32.gmra.mrb[0].mxu0 %v1485
  %v1608 = vpop.f32.mrb[0].mxu0
  %v1609 = vadd.f32 %v1467, %v1608
  %v1610 = vpop.f32.mrb[0].mxu0
  %1611 = vmatprep.mubr.f32.mxu0 0.0
  %1612 = vmatmul.mubr.f32.gmra.mrb[0].mxu0 %v1488
  %v1613 = vpop.f32.mrb[0].mxu0
  %v1614 = vadd.f32 %v1467, %v1613
  %v1615 = vpop.f32.mrb[0].mxu0
  %1616 = vmatprep.mubr.f32.mxu0 0.0
  %1617 = vmatmul.mubr.f32.gmra.mrb[0].mxu0 %v1491
  %v1618 = vpop.f32.mrb[0].mxu0
  %v1619 = vadd.f32 %v1467, %v1618
  %v1620 = vpop.f32.mrb[0].mxu0
  %1621 = vmatprep.mubr.f32.mxu0 0.0
  %1622 = vmatmul.mubr.f32.gmra.mrb[0].mxu0 %v1494
  %v1623 = vpop.f32.mrb[0].mxu0
  %v1624 = vadd.f32 %v1467, %v1623
  %v1625 = vpop.f32.mrb[0].mxu0
  %1626 = vmatprep.mubr.f32.mxu0 0.0
  %1627 = vmatmul.mubr.f32.gmra.mrb[0].mxu0 %v1497
  %v1628 = vpop.f32.mrb[0].mxu0
  %v1629 = vadd.f32 %v1467, %v1628
  %v1630 = vpop.f32.mrb[0].mxu0
  %1631 = vmatprep.mubr.f32.mxu0 0.0
  %1632 = vmatmul.mubr.f32.gmra.mrb[0].mxu0 %v1500
  %v1633 = vpop.f32.mrb[0].mxu0
  %v1634 = vadd.f32 %v1467, %v1633
  %v1635 = vpop.f32.mrb[0].mxu0
  %1636 = vmatprep.mubr.f32.mxu0 0.0
  %1637 = vmatmul.mubr.f32.gmra.mrb[0].mxu0 %v1503
  %v1638 = vpop.f32.mrb[0].mxu0
  %v1639 = vadd.f32 %v1467, %v1638
  %v1640 = vpop.f32.mrb[0].mxu0
  %1641 = vmatprep.mubr.f32.mxu0 0.0
  %1642 = vmatmul.mubr.f32.gmra.mrb[0].mxu0 %v1506
  %v1643 = vpop.f32.mrb[0].mxu0
  %v1644 = vadd.f32 %v1467, %v1643
  %v1645 = vpop.f32.mrb[0].mxu0
  %1646 = vmatprep.mubr.f32.mxu0 0.0
  %1647 = vmatmul.mubr.f32.gmra.mrb[0].mxu0 %v1509
  %v1648 = vpop.f32.mrb[0].mxu0
  %v1649 = vadd.f32 %v1467, %v1648
  %v1650 = vpop.f32.mrb[0].mxu0
  %1651 = vmatprep.mubr.f32.mxu0 0.0
  %1652 = vmatmul.mubr.f32.gmra.mrb[0].mxu0 %v1512
  %v1653 = vpop.f32.mrb[0].mxu0
  %v1654 = vadd.f32 %v1467, %v1653
  %v1655 = vpop.f32.mrb[0].mxu0
  %1656 = vmatprep.mubr.f32.mxu0 0.0
  %1657 = vmatmul.mubr.f32.gmra.mrb[0].mxu0 %v1515
  %v1658 = vpop.f32.mrb[0].mxu0
  %v1659 = vadd.f32 %v1467, %v1658
  %v1660 = vpop.f32.mrb[0].mxu0
  %1661 = vdwg.mxu0
  %1662 = vst.msk [vmem:[%s14] sm:$0xff] %vm72, %v1584
  %1663 = vst.msk [vmem:[%s14 + $0x8] sm:$0xff] %vm72, %v1589
  %1664 = vst.msk [vmem:[%s14 + $0x10] sm:$0xff] %vm72, %v1594
  %1665 = vst.msk [vmem:[%s14 + $0x18] sm:$0xff] %vm72, %v1599
  %1666 = vst.msk [vmem:[%s14 + $0x20] sm:$0xff] %vm72, %v1604
  %1667 = vst.msk [vmem:[%s14 + $0x28] sm:$0xff] %vm72, %v1609
  %1668 = vst.msk [vmem:[%s14 + $0x30] sm:$0xff] %vm72, %v1614
  %1669 = vst.msk [vmem:[%s14 + $0x38] sm:$0xff] %vm72, %v1619
  %1670 = vst.msk [vmem:[%s14 + $0x40] sm:$0xff] %vm72, %v1624
  %1671 = vst.msk [vmem:[%s14 + $0x48] sm:$0xff] %vm72, %v1629
  %1672 = vst.msk [vmem:[%s14 + $0x50] sm:$0xff] %vm72, %v1634
  %1673 = vst.msk [vmem:[%s14 + $0x58] sm:$0xff] %vm72, %v1639
  %1674 = vst.msk [vmem:[%s14 + $0x60] sm:$0xff] %vm72, %v1644
  %1675 = vst.msk [vmem:[%s14 + $0x68] sm:$0xff] %vm72, %v1649
  %1676 = vst.msk [vmem:[%s14 + $0x70] sm:$0xff] %vm72, %v1654
  %1677 = vst.msk [vmem:[%s14 + $0x78] sm:$0xff] %vm72, %v1659
  // Predicated region
  $region58: #{tpu_custom_call.1} parent=0 // pred_check
    _
  $region59: #{tpu_custom_call.1} parent=0 // pred_check_branch
    %1679 = sbr.rel (0) target = $region61
  $region60: #{tpu_custom_call.1} parent=0 // pred_region
    _
  $region61: #{tpu_custom_call.1} parent=0 // pred_fallthru
    _
  // Predicated region
  $region62: #{tpu_custom_call.1} parent=0 // pred_check
    _
  $region63: #{tpu_custom_call.1} parent=0 // pred_check_branch
    %1681 = sbr.rel (0) target = $region65
  $region64: #{tpu_custom_call.1} parent=0 // pred_region
    _
  $region65: #{tpu_custom_call.1} parent=0 // pred_fallthru
    _

</llo_original>
